<compile_context>
chip_gen: v6e
topology: v6e:2x2x1
jax: 0.10.0
libtpu: 0.0.40
codegen_flags: <defaults>
</compile_context>

<pallas_src>
import numpy as np
import jax
import jax.numpy as jnp
from jax.experimental import pallas as pl
from jax.experimental.pallas import tpu as pltpu

LN_EPS = 1e-5


def _round_up(x: int, m: int) -> int:
    return ((x + m - 1) // m) * m


def polyline_kernel(x_ref, w_cat_ref, b_cat_ref, avg_ref, w_gcn_ref, b_gcn_ref,
                    o_ref):
    cf = avg_ref.shape[-1]

    x = x_ref[...]                                           # (TB, CF), f32
    w_cat = w_cat_ref[...]                                   # (CF, 2*CF)

    # One matmul produces [h | mean(h)]; split at lane CF is vreg-aligned.
    hm = jnp.dot(x.astype(w_cat.dtype), w_cat,
                 preferred_element_type=jnp.float32) + b_cat_ref[...]
    h = hm[:, :cf]
    m = hm[:, cf:]

    # Second moment via the per-point block-mean operator; independent of `m`,
    # so the LayerNorm stats no longer serialize two dependent MXU ops.
    avg = avg_ref[...]
    q = jnp.dot((h * h).astype(avg.dtype), avg,
                preferred_element_type=jnp.float32)
    v = jnp.maximum(q - m * m, 0.0)                          # biased variance (f32)
    hn = (h - m) * jax.lax.rsqrt(v + LN_EPS)

    # LN affine + GCN weight + adjacency mix folded into one constant operator.
    w_gcn = w_gcn_ref[...]
    out = jnp.dot(hn.astype(w_gcn.dtype), w_gcn,
                  preferred_element_type=jnp.float32) + b_gcn_ref[...]
    o_ref[...] = jnp.maximum(out, 0.0).astype(o_ref.dtype)


def polyline_layer(inputs, w_enc_t, b_enc, gamma, beta, w_gcn_t, b_gcn, adj,
                   *, block_b=512, use_bf16=True):
    """inputs: (B, C, F). Linear weights are pre-transposed: (F_in, F_out)."""
    B, C, F = inputs.shape
    CF = C * F
    f32 = jnp.float32
    hi = jax.lax.Precision.HIGHEST

    # ---- constant folding (wrapper-side; would be cached at module init) -----
    eye_c = jnp.eye(C, dtype=f32)
    w_enc_big = jnp.kron(eye_c, w_enc_t.astype(f32))               # kron(I_C, W_enc^T)
    w_gcn_big = jnp.kron(eye_c, w_gcn_t.astype(f32))               # kron(I_C, W_gcn^T)
    avg_big = jnp.kron(eye_c, jnp.full((F, F), 1.0 / F, f32))      # per-point mean op
    adj_big = jnp.kron(adj.T.astype(f32), jnp.eye(F, dtype=f32))   # kron(adj^T, I_F)

    tile = lambda p: jnp.tile(jnp.reshape(p, (1, F)).astype(f32), (1, C))
    b_enc_big = tile(b_enc)
    gamma_big = tile(gamma)
    beta_big = tile(beta)
    b_gcn_big = tile(b_gcn)

    # (a) encoder + per-point mean fused into one (CF, 2*CF) RHS.
    w_cat = jnp.concatenate(
        [w_enc_big, jnp.dot(w_enc_big, avg_big, precision=hi)], axis=1)
    b_cat = jnp.concatenate(
        [b_enc_big, jnp.dot(b_enc_big, avg_big, precision=hi)], axis=1)

    # (b) LN affine + GCN weight + adjacency mix fused: out = hn @ W' + b'.
    w_ga = jnp.dot(w_gcn_big, adj_big, precision=hi)        # kron(adj^T, W_gcn^T)
    w_gcn_fused = gamma_big.T * w_ga                         # diag(gamma) @ w_ga
    b_gcn_fused = (jnp.dot(beta_big, w_ga, precision=hi) +
                   jnp.dot(b_gcn_big, adj_big, precision=hi))

    # Fused products are built in f32; only MXU operands are (optionally) cast.
    mm_dtype = jnp.bfloat16 if use_bf16 else f32
    w_cat = w_cat.astype(mm_dtype)
    avg_big = avg_big.astype(mm_dtype)          # entries exactly 1/F (bf16-exact)
    w_gcn_fused = w_gcn_fused.astype(mm_dtype)

    # ---- batch tiling: large tiles, but >=2 grid steps so both v7x TCs run ---
    b_pad8 = _round_up(max(B, 8), 8)
    tb = max(8, min(block_b, b_pad8))
    if b_pad8 >= 16 and b_pad8 // tb < 2:
        tb = _round_up((b_pad8 + 1) // 2, 8)
    b_pad = _round_up(b_pad8, tb)

    x2d = inputs.reshape(B, CF).astype(f32)
    if b_pad != B:
        x2d = jnp.pad(x2d, ((0, b_pad - B), (0, 0)))

    full = lambda r, c: pl.BlockSpec((r, c), lambda b: (0, 0))

    out2d = pl.pallas_call(
        polyline_kernel,
        out_shape=jax.ShapeDtypeStruct((b_pad, CF), inputs.dtype),
        grid_spec=pltpu.PrefetchScalarGridSpec(
            num_scalar_prefetch=0,
            grid=(b_pad // tb,),
            in_specs=[
                pl.BlockSpec((tb, CF), lambda b: (b, 0)),   # x (lane-dense)
                full(CF, 2 * CF),                           # [W_enc | W_enc@avg]
                full(1, 2 * CF),                            # [b_enc | b_enc@avg]
                full(CF, CF),                               # per-point mean op
                full(CF, CF),                               # fused LN+GCN+adj op
                full(1, CF),                                # fused bias
            ],
            out_specs=pl.BlockSpec((tb, CF), lambda b: (b, 0)),
        ),
        compiler_params=pltpu.CompilerParams(
            dimension_semantics=("parallel",)),
    )(x2d, w_cat, b_cat, avg_big, w_gcn_fused, b_gcn_fused)

    return out2d[:B].reshape(B, C, F)


def make_adjacency(cluster_size: int) -> np.ndarray:
    # raw_adj[j, i] = 1 if i >= j else 0  (upper triangular incl. diag)
    idx = np.arange(cluster_size)
    raw = (idx[None, :] >= idx[:, None]).astype(np.float32)
    rowsum = raw.sum(axis=1)
    return (raw / rowsum[:, None]).astype(np.float32)


def reference_forward(inputs, w_enc_t, b_enc, gamma, beta, w_gcn_t, b_gcn, adj):
    x = inputs @ w_enc_t + b_enc
    mean = x.mean(-1, keepdims=True)
    var = ((x - mean) ** 2).mean(-1, keepdims=True)
    x = (x - mean) / jnp.sqrt(var + LN_EPS) * gamma + beta
    h = x @ w_gcn_t + b_gcn
    return jnp.maximum(jnp.einsum("ck,bkf->bcf", adj, h), 0.0)


if __name__ == "__main__":
    B, C, F = 256, 8, 32  # batch of polylines, cluster_size, in_features

    key = jax.random.PRNGKey(0)
    k_x, k_we, k_be, k_wg, k_bg = jax.random.split(key, 5)

    inputs = jax.random.normal(k_x, (B, C, F), dtype=jnp.float32)

    # Deterministic parameter init (Linear(F, F) x2, LayerNorm affine).
    bound = 1.0 / np.sqrt(F)
    w_enc_t = jax.random.uniform(k_we, (F, F), jnp.float32, -bound, bound)  # W^T
    b_enc = jax.random.uniform(k_be, (F,), jnp.float32, -bound, bound)
    gamma = jnp.ones((F,), jnp.float32)
    beta = jnp.zeros((F,), jnp.float32)
    w_gcn_t = jax.random.uniform(k_wg, (F, F), jnp.float32, -bound, bound)  # W^T
    b_gcn = jax.random.uniform(k_bg, (F,), jnp.float32, -bound, bound)
    adj = jnp.asarray(make_adjacency(C))

    ref = reference_forward(inputs, w_enc_t, b_enc, gamma, beta,
                            w_gcn_t, b_gcn, adj)
    ref = np.asarray(jax.block_until_ready(ref))

    # Exact-semantics path (f32 MXU) -- tight tolerance vs. the reference.
    out_f32 = polyline_layer(inputs, w_enc_t, b_enc, gamma, beta,
                             w_gcn_t, b_gcn, adj, use_bf16=False)
    out_f32 = np.asarray(jax.block_until_ready(out_f32))
    np.testing.assert_allclose(out_f32, ref, rtol=1e-4, atol=1e-4)

    # Fast path (all matmul operands bf16, f32 accumulation; no f32 MXU passes).
    out_bf16 = polyline_layer(inputs, w_enc_t, b_enc, gamma, beta,
                              w_gcn_t, b_gcn, adj, use_bf16=True)
    out_bf16 = np.asarray(jax.block_until_ready(out_bf16))
    np.testing.assert_allclose(out_bf16, ref, rtol=5e-2, atol=5e-2)

    print("KERNEL_OK")
</pallas_src>

<mosaic_0001>
module attributes {stable_mosaic.version = 11 : i64} {
  func.func @polyline_kernel(%arg0: i32, %arg1: memref<128x256xf32, #tpu.memory_space<vmem>>, %arg2: memref<256x512xf32, #tpu.memory_space<vmem>>, %arg3: memref<1x512xf32, #tpu.memory_space<vmem>>, %arg4: memref<256x256xf32, #tpu.memory_space<vmem>>, %arg5: memref<256x256xf32, #tpu.memory_space<vmem>>, %arg6: memref<1x256xf32, #tpu.memory_space<vmem>>, %arg7: memref<128x256xf32, #tpu.memory_space<vmem>>) attributes {dimension_semantics = [#tpu.dimension_semantics<parallel>], iteration_bounds = array<i64: 2>, scalar_prefetch = 0 : i64, scratch_operands = 0 : i64, tpu.core_type = #tpu.core_type<tc>, window_params = [{transform_indices = @transform_0, window_bounds = array<i64: 128, 256>}, {pipeline_mode = #tpu.pipeline_mode<synchronous>, transform_indices = @transform_1, window_bounds = array<i64: 256, 512>}, {pipeline_mode = #tpu.pipeline_mode<synchronous>, transform_indices = @transform_2, window_bounds = array<i64: 1, 512>}, {pipeline_mode = #tpu.pipeline_mode<synchronous>, transform_indices = @transform_3, window_bounds = array<i64: 256, 256>}, {pipeline_mode = #tpu.pipeline_mode<synchronous>, transform_indices = @transform_4, window_bounds = array<i64: 256, 256>}, {pipeline_mode = #tpu.pipeline_mode<synchronous>, transform_indices = @transform_5, window_bounds = array<i64: 1, 256>}, {transform_indices = @transform_6, window_bounds = array<i64: 128, 256>}]} {
    %c0 = arith.constant 0 : index
    %c0_0 = arith.constant 0 : index
    %0 = vector.load %arg1[%c0, %c0_0] : memref<128x256xf32, #tpu.memory_space<vmem>>, vector<128x256xf32>
    %c0_1 = arith.constant 0 : index
    %c0_2 = arith.constant 0 : index
    %1 = vector.load %arg2[%c0_1, %c0_2] : memref<256x512xf32, #tpu.memory_space<vmem>>, vector<256x512xf32>
    %cst = arith.constant dense<0.000000e+00> : vector<128x512xf32>
    %2 = tpu.matmul %0, %1, %cst {dimension_numbers = #tpu.dot_dimension_numbers<[1], [0], [0], [1], [0, 0, 1, 1], [], []>} : vector<128x256xf32>, vector<256x512xf32>, vector<128x512xf32> -> vector<128x512xf32>
    %c0_3 = arith.constant 0 : index
    %c0_4 = arith.constant 0 : index
    %3 = vector.load %arg3[%c0_3, %c0_4] : memref<1x512xf32, #tpu.memory_space<vmem>>, vector<1x512xf32>
    %4 = vector.broadcast %3 : vector<1x512xf32> to vector<128x512xf32>
    %5 = arith.addf %2, %4 : vector<128x512xf32>
    %6 = vector.extract_strided_slice %5 {offsets = [0, 0], sizes = [128, 256], strides = [1, 1]} : vector<128x512xf32> to vector<128x256xf32>
    %7 = vector.extract_strided_slice %5 {offsets = [0, 256], sizes = [128, 256], strides = [1, 1]} : vector<128x512xf32> to vector<128x256xf32>
    %c0_5 = arith.constant 0 : index
    %c0_6 = arith.constant 0 : index
    %8 = vector.load %arg4[%c0_5, %c0_6] : memref<256x256xf32, #tpu.memory_space<vmem>>, vector<256x256xf32>
    %9 = arith.mulf %6, %6 : vector<128x256xf32>
    %cst_7 = arith.constant dense<0.000000e+00> : vector<128x256xf32>
    %10 = tpu.matmul %9, %8, %cst_7 {dimension_numbers = #tpu.dot_dimension_numbers<[1], [0], [0], [1], [0, 0, 1, 1], [], []>} : vector<128x256xf32>, vector<256x256xf32>, vector<128x256xf32> -> vector<128x256xf32>
    %11 = arith.mulf %7, %7 : vector<128x256xf32>
    %12 = arith.subf %10, %11 : vector<128x256xf32>
    %cst_8 = arith.constant 0.000000e+00 : f32
    %13 = vector.broadcast %cst_8 : f32 to vector<128x256xf32>
    %14 = arith.maximumf %12, %13 : vector<128x256xf32>
    %15 = arith.subf %6, %7 : vector<128x256xf32>
    %cst_9 = arith.constant 9.99999974E-6 : f32
    %16 = vector.broadcast %cst_9 : f32 to vector<128x256xf32>
    %17 = arith.addf %14, %16 : vector<128x256xf32>
    %18 = math.rsqrt %17 : vector<128x256xf32>
    %19 = arith.mulf %15, %18 : vector<128x256xf32>
    %c0_10 = arith.constant 0 : index
    %c0_11 = arith.constant 0 : index
    %20 = vector.load %arg5[%c0_10, %c0_11] : memref<256x256xf32, #tpu.memory_space<vmem>>, vector<256x256xf32>
    %cst_12 = arith.constant dense<0.000000e+00> : vector<128x256xf32>
    %21 = tpu.matmul %19, %20, %cst_12 {dimension_numbers = #tpu.dot_dimension_numbers<[1], [0], [0], [1], [0, 0, 1, 1], [], []>} : vector<128x256xf32>, vector<256x256xf32>, vector<128x256xf32> -> vector<128x256xf32>
    %c0_13 = arith.constant 0 : index
    %c0_14 = arith.constant 0 : index
    %22 = vector.load %arg6[%c0_13, %c0_14] : memref<1x256xf32, #tpu.memory_space<vmem>>, vector<1x256xf32>
    %23 = vector.broadcast %22 : vector<1x256xf32> to vector<128x256xf32>
    %24 = arith.addf %21, %23 : vector<128x256xf32>
    %cst_15 = arith.constant 0.000000e+00 : f32
    %25 = vector.broadcast %cst_15 : f32 to vector<128x256xf32>
    %26 = arith.maximumf %24, %25 : vector<128x256xf32>
    %c0_16 = arith.constant 0 : index
    %c0_17 = arith.constant 0 : index
    %27 = vector.load %arg7[%c0_16, %c0_17] : memref<128x256xf32, #tpu.memory_space<vmem>>, vector<128x256xf32>
    tpu.vector_store %arg7[%c0_16, %c0_17], %26 {strides = array<i32>} : memref<128x256xf32, #tpu.memory_space<vmem>>, vector<128x256xf32>,
    return
  }
  func.func @transform_0(%arg0: i32) -> (i32, i32) {
    %c0_i32 = arith.constant 0 : i32
    %c0_i32_0 = arith.constant 0 : i32
    return %arg0, %c0_i32 : i32, i32
  }
  func.func @transform_1(%arg0: i32) -> (i32, i32) {
    %c0_i32 = arith.constant 0 : i32
    %c0_i32_0 = arith.constant 0 : i32
    %c0_i32_1 = arith.constant 0 : i32
    return %c0_i32, %c0_i32_0 : i32, i32
  }
  func.func @transform_2(%arg0: i32) -> (i32, i32) {
    %c0_i32 = arith.constant 0 : i32
    %c0_i32_0 = arith.constant 0 : i32
    %c0_i32_1 = arith.constant 0 : i32
    return %c0_i32, %c0_i32_0 : i32, i32
  }
  func.func @transform_3(%arg0: i32) -> (i32, i32) {
    %c0_i32 = arith.constant 0 : i32
    %c0_i32_0 = arith.constant 0 : i32
    %c0_i32_1 = arith.constant 0 : i32
    return %c0_i32, %c0_i32_0 : i32, i32
  }
  func.func @transform_4(%arg0: i32) -> (i32, i32) {
    %c0_i32 = arith.constant 0 : i32
    %c0_i32_0 = arith.constant 0 : i32
    %c0_i32_1 = arith.constant 0 : i32
    return %c0_i32, %c0_i32_0 : i32, i32
  }
  func.func @transform_5(%arg0: i32) -> (i32, i32) {
    %c0_i32 = arith.constant 0 : i32
    %c0_i32_0 = arith.constant 0 : i32
    %c0_i32_1 = arith.constant 0 : i32
    return %c0_i32, %c0_i32_0 : i32, i32
  }
  func.func @transform_6(%arg0: i32) -> (i32, i32) {
    %c0_i32 = arith.constant 0 : i32
    %c0_i32_0 = arith.constant 0 : i32
    return %arg0, %c0_i32 : i32, i32
  }
}

</mosaic_0001>

<llo_original>
// kernel: tpu_custom_call.1
$region0: #{tpu_custom_call.1}
  #allocation0 [shape = 'u32[]', space=smem, size = 0x4, offset = 0x4, fixed_abs, tag = 'smem constant byte address 0x4 - core index']
  #allocation1 [shape = 'u32[144,128]{1,0:T(1,128)}', space=vmem, size = 0x12000, scoped, tag = 'internal scratch']
  %s0 = inlined_call_operand.hbm [shape: f32[256,256], index: 0, kind: input, shape index: {}]
  %s1 = inlined_call_operand.hbm [shape: f32[256,512], index: 1, kind: input, shape index: {}]
  %s2 = inlined_call_operand.hbm [shape: f32[1,512], index: 2, kind: input, shape index: {}]
  %s3 = inlined_call_operand.hbm [shape: f32[256,256], index: 3, kind: input, shape index: {}]
  %s4 = inlined_call_operand.hbm [shape: f32[256,256], index: 4, kind: input, shape index: {}]
  %s5 = inlined_call_operand.vmem [shape: f32[1,256], index: 5, kind: input, shape index: {}]
  %s6 = inlined_call_operand.hbm [shape: f32[256,256], index: 6, kind: output, shape index: {}]
  %s7 = sld [smem:[#allocation0]]
  $region77: #{tpu_custom_call.1} parent=0
    _
  %s9 = ssub.s32 1, %s7
  %s10 = scalar_select 0, %s9, %s7
  $region1: #{tpu_custom_call.1} parent=0
    #allocation2 [shape = 'u8[262144]{0}', space=vmem, size = 0x40000, scoped, tag = 'input window, operand 0']
    #allocation3 [shape = 's32[2]{0}', space=sflag, size = 0x8, scoped, tag = 'scoped memory for tpu_custom_call.1']
    #allocation4 [shape = 's32[2]{0}', space=sflag, size = 0x8, scoped, tag = 'scoped memory for tpu_custom_call.1']
    #allocation5 [shape = 'u8[524288]{0}', space=vmem, size = 0x80000, scoped, tag = 'input window, operand 1, single buffered']
    #allocation6 [shape = 's32[1]{0}', space=sflag, size = 0x4, scoped, tag = 'scoped memory for tpu_custom_call.1']
    #allocation7 [shape = 'u8[2048]{0}', space=vmem, size = 0x800, scoped, tag = 'input window, operand 2, single buffered']
    #allocation8 [shape = 'u8[262144]{0}', space=vmem, size = 0x40000, scoped, tag = 'input window, operand 3, single buffered']
    #allocation9 [shape = 's32[1]{0}', space=sflag, size = 0x4, scoped, tag = 'scoped memory for tpu_custom_call.1']
    #allocation10 [shape = 'u8[262144]{0}', space=vmem, size = 0x40000, scoped, tag = 'input window, operand 4, single buffered']
    #allocation11 [shape = 'u8[262144]{0}', space=vmem, size = 0x40000, scoped, tag = 'output window, operand 0']
    %11 = vsyncpa [#allocation3], 0
    %s12 = scalar_lea.sflag [#allocation3], 1
    %13 = vsyncpa %s12, 0
    %14 = vsyncpa [#allocation6], 0
    %15 = vsyncpa [#allocation9], 0
    %16 = vsyncpa [#allocation4], 0
    %s17 = scalar_lea.sflag [#allocation4], 1
    %18 = vsyncpa %s17, 0
    loop: start=0, step=1, limit=4
    $region2: #{tpu_custom_call.1} parent=1 // loop_pre_header
      _
    $region3: #{tpu_custom_call.1} parent=1 // loop_header
      %s20 = sphi 0, %s24
      %p21 = scmp.ge.s32.totalorder %s20, 4
      %s30 = sphi 0, %s32
      %s33 = sphi 0, %s30
      %s34 = sphi 0, %s33
      %s50 = sphi 0, %s34
      %s54 = sphi 0, %s54
      %s56 = sphi 0, %s54
      %s57 = sphi 0, %s56
      %s71 = sphi 0, %s57
      %s75 = sphi 0, %s75
      %s77 = sphi 0, %s75
      %s78 = sphi 0, %s77
      %s92 = sphi 0, %s78
      %s96 = sphi 0, %s96
      %s98 = sphi 0, %s96
      %s99 = sphi 0, %s98
      %s113 = sphi 0, %s99
      %s117 = sphi 0, %s117
      %s119 = sphi 0, %s117
      %s120 = sphi 0, %s119
      %s134 = sphi 0, %s120
      %s138 = sphi 0, %s138
      %s140 = sphi 0, %s138
      %s141 = sphi 0, %s140
      %s155 = sphi 0, %s141
      %s161 = sphi 0, %s163
      %s164 = sphi 0, %s161
      %s165 = sphi 0, %s164
      %s181 = sphi 0, %s165
    $region4: #{tpu_custom_call.1} parent=1 // loop_header_branch
      %23 = sbr.rel (%p21) target = $region8
    $region5: #{tpu_custom_call.1} parent=1 // loop_body
      %s25 = ssub.s32 %s20, 1
      %s26 = ssub.s32 %s20, 2
      %s27 = sadd.s32 %s20, 1
      %s28 = ssub.s32 %s20, %s27
      %p29 = scmp.eq.s32.totalorder %s28, 0
      %s31 = sadd.s32 %s30, 1
      %s32 = scalar_select %p29, %s30, %s31
      %p35 = pneg %p29
      %p36 = scmp.eq.s32.totalorder %s20, 1
      %p37 = por %p35, %p36
      %p38 = scmp.ne.s32.totalorder %s30, %s33
      %p39 = scmp.eq.s32.totalorder %s20, 0
      %p40 = por %p38, %p39
      %p41 = scmp.ne.s32.totalorder %s30, %s33
      %p42 = scmp.eq.s32.totalorder %s25, 1
      %p43 = por %p41, %p42
      %p44 = scmp.ne.s32.totalorder %s33, %s34
      %p45 = scmp.eq.s32.totalorder %s25, 0
      %p46 = por %p44, %p45
      %p47 = scmp.ne.s32.totalorder %s33, %s34
      %p48 = scmp.eq.s32.totalorder %s26, 1
      %p49 = por %p47, %p48
      %p51 = scmp.ne.s32.totalorder %s34, %s50
      %p52 = scmp.eq.s32.totalorder %s26, 0
      %p53 = por %p51, %p52
      %s55 = sadd.s32 %s54, 1
      %p58 = scmp.eq.s32.totalorder %s20, 1
      %p59 = scmp.ne.s32.totalorder %s54, %s56
      %p60 = scmp.eq.s32.totalorder %s20, 0
      %p61 = por %p59, %p60
      %p62 = scmp.ne.s32.totalorder %s54, %s56
      %p63 = scmp.eq.s32.totalorder %s25, 1
      %p64 = por %p62, %p63
      %p65 = scmp.ne.s32.totalorder %s56, %s57
      %p66 = scmp.eq.s32.totalorder %s25, 0
      %p67 = por %p65, %p66
      %p68 = scmp.ne.s32.totalorder %s56, %s57
      %p69 = scmp.eq.s32.totalorder %s26, 1
      %p70 = por %p68, %p69
      %p72 = scmp.ne.s32.totalorder %s57, %s71
      %p73 = scmp.eq.s32.totalorder %s26, 0
      %p74 = por %p72, %p73
      %s76 = sadd.s32 %s75, 1
      %p79 = scmp.eq.s32.totalorder %s20, 1
      %p80 = scmp.ne.s32.totalorder %s75, %s77
      %p81 = scmp.eq.s32.totalorder %s20, 0
      %p82 = por %p80, %p81
      %p83 = scmp.ne.s32.totalorder %s75, %s77
      %p84 = scmp.eq.s32.totalorder %s25, 1
      %p85 = por %p83, %p84
      %p86 = scmp.ne.s32.totalorder %s77, %s78
      %p87 = scmp.eq.s32.totalorder %s25, 0
      %p88 = por %p86, %p87
      %p89 = scmp.ne.s32.totalorder %s77, %s78
      %p90 = scmp.eq.s32.totalorder %s26, 1
      %p91 = por %p89, %p90
      %p93 = scmp.ne.s32.totalorder %s78, %s92
      %p94 = scmp.eq.s32.totalorder %s26, 0
      %p95 = por %p93, %p94
      %s97 = sadd.s32 %s96, 1
      %p100 = scmp.eq.s32.totalorder %s20, 1
      %p101 = scmp.ne.s32.totalorder %s96, %s98
      %p102 = scmp.eq.s32.totalorder %s20, 0
      %p103 = por %p101, %p102
      %p104 = scmp.ne.s32.totalorder %s96, %s98
      %p105 = scmp.eq.s32.totalorder %s25, 1
      %p106 = por %p104, %p105
      %p107 = scmp.ne.s32.totalorder %s98, %s99
      %p108 = scmp.eq.s32.totalorder %s25, 0
      %p109 = por %p107, %p108
      %p110 = scmp.ne.s32.totalorder %s98, %s99
      %p111 = scmp.eq.s32.totalorder %s26, 1
      %p112 = por %p110, %p111
      %p114 = scmp.ne.s32.totalorder %s99, %s113
      %p115 = scmp.eq.s32.totalorder %s26, 0
      %p116 = por %p114, %p115
      %s118 = sadd.s32 %s117, 1
      %p121 = scmp.eq.s32.totalorder %s20, 1
      %p122 = scmp.ne.s32.totalorder %s117, %s119
      %p123 = scmp.eq.s32.totalorder %s20, 0
      %p124 = por %p122, %p123
      %p125 = scmp.ne.s32.totalorder %s117, %s119
      %p126 = scmp.eq.s32.totalorder %s25, 1
      %p127 = por %p125, %p126
      %p128 = scmp.ne.s32.totalorder %s119, %s120
      %p129 = scmp.eq.s32.totalorder %s25, 0
      %p130 = por %p128, %p129
      %p131 = scmp.ne.s32.totalorder %s119, %s120
      %p132 = scmp.eq.s32.totalorder %s26, 1
      %p133 = por %p131, %p132
      %p135 = scmp.ne.s32.totalorder %s120, %s134
      %p136 = scmp.eq.s32.totalorder %s26, 0
      %p137 = por %p135, %p136
      %s139 = sadd.s32 %s138, 1
      %p142 = scmp.eq.s32.totalorder %s20, 1
      %p143 = scmp.ne.s32.totalorder %s138, %s140
      %p144 = scmp.eq.s32.totalorder %s20, 0
      %p145 = por %p143, %p144
      %p146 = scmp.ne.s32.totalorder %s138, %s140
      %p147 = scmp.eq.s32.totalorder %s25, 1
      %p148 = por %p146, %p147
      %p149 = scmp.ne.s32.totalorder %s140, %s141
      %p150 = scmp.eq.s32.totalorder %s25, 0
      %p151 = por %p149, %p150
      %p152 = scmp.ne.s32.totalorder %s140, %s141
      %p153 = scmp.eq.s32.totalorder %s26, 1
      %p154 = por %p152, %p153
      %p156 = scmp.ne.s32.totalorder %s141, %s155
      %p157 = scmp.eq.s32.totalorder %s26, 0
      %p158 = por %p156, %p157
      %s159 = ssub.s32 %s20, %s27
      %p160 = scmp.eq.s32.totalorder %s159, 0
      %s162 = sadd.s32 %s161, 1
      %s163 = scalar_select %p160, %s161, %s162
      %p166 = pneg %p160
      %p167 = scmp.eq.s32.totalorder %s20, 1
      %p168 = por %p166, %p167
      %p169 = scmp.ne.s32.totalorder %s161, %s164
      %p170 = scmp.eq.s32.totalorder %s20, 0
      %p171 = por %p169, %p170
      %p172 = scmp.ne.s32.totalorder %s161, %s164
      %p173 = scmp.eq.s32.totalorder %s25, 1
      %p174 = por %p172, %p173
      %p175 = scmp.ne.s32.totalorder %s164, %s165
      %p176 = scmp.eq.s32.totalorder %s25, 0
      %p177 = por %p175, %p176
      %p178 = scmp.ne.s32.totalorder %s164, %s165
      %p179 = scmp.eq.s32.totalorder %s26, 1
      %p180 = por %p178, %p179
      %p182 = scmp.ne.s32.totalorder %s165, %s181
      %p183 = scmp.eq.s32.totalorder %s26, 0
      %p184 = por %p182, %p183
      %p185 = scmp.le.s32.totalorder 1, %s20
      %p186 = scmp.lt.s32.totalorder %s20, 3
      %p187 = pnand %p185, %p186
      %p188 = pneg %p187
      // Predicated region
      $region9: #{tpu_custom_call.1} parent=5 // pred_check
        _
      $region10: #{tpu_custom_call.1} parent=5 // pred_check_branch
        %190 = sbr.rel (%p187) target = $region12
      $region11: #{tpu_custom_call.1} parent=5 // pred_region
        %s191 = ssub.s32 %s20, 1
        // Predicated region
        $region13: #{tpu_custom_call.1} parent=11 // pred_check
          %p192 = pneg %p67
        $region14: #{tpu_custom_call.1} parent=11 // pred_check_branch
          %194 = sbr.rel (%p192) target = $region16
        $region15: #{tpu_custom_call.1} parent=11 // pred_region
          %s196 = ssub.s32 16384, 16384
          %197 = vsyncadd [#allocation6], %s196
          %s198 = sshll.u32 [#allocation5], 4
          %s199 = int_to_ptr.vmem [resolvable:$true] %s198
          %204 = dma.hbm_to_vmem [thread:$0]  %s1, 16384, %s199, [#allocation6], 512, 512, 32
        $region16: #{tpu_custom_call.1} parent=11 // pred_fallthru
          _
        // Predicated region
        $region17: #{tpu_custom_call.1} parent=11 // pred_check
          %p205 = pneg %p88
        $region18: #{tpu_custom_call.1} parent=11 // pred_check_branch
          %207 = sbr.rel (%p205) target = $region20
        $region19: #{tpu_custom_call.1} parent=11 // pred_region
          %s209 = ssub.s32 64, 64
          %210 = vsyncadd [#allocation6], %s209
          %s212 = sshll.u32 [#allocation7], 4
          %s213 = int_to_ptr.vmem [resolvable:$true] %s212
          %215 = dma.hbm_to_vmem [thread:$0]  %s2, 64, %s213, [#allocation6]
        $region20: #{tpu_custom_call.1} parent=11 // pred_fallthru
          _
        // Predicated region
        $region21: #{tpu_custom_call.1} parent=11 // pred_check
          %p216 = pneg %p109
        $region22: #{tpu_custom_call.1} parent=11 // pred_check_branch
          %218 = sbr.rel (%p216) target = $region24
        $region23: #{tpu_custom_call.1} parent=11 // pred_region
          %s220 = ssub.s32 8192, 8192
          %221 = vsyncadd [#allocation9], %s220
          %s222 = sshll.u32 [#allocation8], 4
          %s223 = int_to_ptr.vmem [resolvable:$true] %s222
          %228 = dma.hbm_to_vmem [thread:$0]  %s3, 8192, %s223, [#allocation9], 256, 256, 16
        $region24: #{tpu_custom_call.1} parent=11 // pred_fallthru
          _
        // Predicated region
        $region25: #{tpu_custom_call.1} parent=11 // pred_check
          %p229 = pneg %p130
        $region26: #{tpu_custom_call.1} parent=11 // pred_check_branch
          %231 = sbr.rel (%p229) target = $region28
        $region27: #{tpu_custom_call.1} parent=11 // pred_region
          %s233 = ssub.s32 8192, 8192
          %234 = vsyncadd [#allocation9], %s233
          %s235 = sshll.u32 [#allocation10], 4
          %s236 = int_to_ptr.vmem [resolvable:$true] %s235
          %241 = dma.hbm_to_vmem [thread:$0]  %s4, 8192, %s236, [#allocation9], 256, 256, 16
        $region28: #{tpu_custom_call.1} parent=11 // pred_fallthru
          _
        // Predicated region
        $region29: #{tpu_custom_call.1} parent=11 // pred_check
          %p242 = pneg %p151
        $region30: #{tpu_custom_call.1} parent=11 // pred_check_branch
          %244 = sbr.rel (%p242) target = $region32
        $region31: #{tpu_custom_call.1} parent=11 // pred_region
          _
        $region32: #{tpu_custom_call.1} parent=11 // pred_fallthru
          _
      $region12: #{tpu_custom_call.1} parent=5 // pred_fallthru
        _
      %p245 = scmp.lt.s32.totalorder %s20, 2
      // Predicated region
      $region33: #{tpu_custom_call.1} parent=5 // pred_check
        %p246 = pneg %p245
      $region34: #{tpu_custom_call.1} parent=5 // pred_check_branch
        %248 = sbr.rel (%p246) target = $region36
      $region35: #{tpu_custom_call.1} parent=5 // pred_region
        // Predicated region
        $region37: #{tpu_custom_call.1} parent=35 // pred_check
          %p249 = pneg %p40
        $region38: #{tpu_custom_call.1} parent=35 // pred_check_branch
          %251 = sbr.rel (%p249) target = $region40
        $region39: #{tpu_custom_call.1} parent=35 // pred_region
          %s252 = sand.u32 %s30, 1
          %s253 = scalar_lea.sflag [#allocation3], %s252
          %s254 = sand.u32 %s30, 1
          %s255 = smul.addr %s254, 256
          %s256 = scalar_lea.vmem [#allocation2], %s255
          %s257 = smul.u32 16, %s20
          %s259 = ssub.s32 4096, 4096
          %260 = vsyncadd %s253, %s259
          %s261 = smul.addr %s257, 2
          %s262 = smul.addr %s261, 128
          %s263 = scalar_lea.hbm %s0, %s262
          %s264 = sshll.u32 %s256, 4
          %s265 = int_to_ptr.vmem [resolvable:$true] %s264
          %270 = dma.hbm_to_vmem [thread:$0]  %s263, 4096, %s265, %s253, 256, 256, 16
        $region40: #{tpu_custom_call.1} parent=35 // pred_fallthru
          _
      $region36: #{tpu_custom_call.1} parent=5 // pred_fallthru
        _
      %p271 = scmp.le.s32.totalorder 1, %s20
      %p272 = scmp.lt.s32.totalorder %s20, 3
      %p273 = pnand %p271, %p272
      %p274 = pneg %p273
      // Predicated region
      $region41: #{tpu_custom_call.1} parent=5 // pred_check
        _
      $region42: #{tpu_custom_call.1} parent=5 // pred_check_branch
        %276 = sbr.rel (%p273) target = $region44
      $region43: #{tpu_custom_call.1} parent=5 // pred_region
        %s277 = ssub.s32 %s20, 1
        %s278 = sand.u32 %s33, 1
        %s279 = scalar_lea.sflag [#allocation3], %s278
        %s280 = sand.u32 %s33, 1
        %s281 = smul.addr %s280, 256
        %s282 = scalar_lea.vmem [#allocation2], %s281
        // Predicated region
        $region45: #{tpu_custom_call.1} parent=43 // pred_check
          %p283 = pneg %p46
        $region46: #{tpu_custom_call.1} parent=43 // pred_check_branch
          %285 = sbr.rel (%p283) target = $region48
        $region47: #{tpu_custom_call.1} parent=43 // pred_region
          %286 = dma.done %s279, 4096
        $region48: #{tpu_custom_call.1} parent=43 // pred_fallthru
          _
        // Predicated region
        $region49: #{tpu_custom_call.1} parent=43 // pred_check
          %p287 = pneg %p67
        $region50: #{tpu_custom_call.1} parent=43 // pred_check_branch
          %289 = sbr.rel (%p287) target = $region52
        $region51: #{tpu_custom_call.1} parent=43 // pred_region
          %290 = dma.done [#allocation6], 16384
        $region52: #{tpu_custom_call.1} parent=43 // pred_fallthru
          _
        // Predicated region
        $region53: #{tpu_custom_call.1} parent=43 // pred_check
          %p291 = pneg %p88
        $region54: #{tpu_custom_call.1} parent=43 // pred_check_branch
          %293 = sbr.rel (%p291) target = $region56
        $region55: #{tpu_custom_call.1} parent=43 // pred_region
          %294 = dma.done [#allocation6], 64
        $region56: #{tpu_custom_call.1} parent=43 // pred_fallthru
          _
        // Predicated region
        $region57: #{tpu_custom_call.1} parent=43 // pred_check
          %p295 = pneg %p109
        $region58: #{tpu_custom_call.1} parent=43 // pred_check_branch
          %297 = sbr.rel (%p295) target = $region60
        $region59: #{tpu_custom_call.1} parent=43 // pred_region
          %298 = dma.done [#allocation9], 8192
        $region60: #{tpu_custom_call.1} parent=43 // pred_fallthru
          _
        // Predicated region
        $region61: #{tpu_custom_call.1} parent=43 // pred_check
          %p299 = pneg %p130
        $region62: #{tpu_custom_call.1} parent=43 // pred_check_branch
          %301 = sbr.rel (%p299) target = $region64
        $region63: #{tpu_custom_call.1} parent=43 // pred_region
          %302 = dma.done [#allocation9], 8192
        $region64: #{tpu_custom_call.1} parent=43 // pred_fallthru
          _
        %s303 = sand.u32 %s33, 1
        %s304 = scalar_lea.sflag [#allocation3], %s303
        %s305 = sand.u32 %s33, 1
        %s306 = smul.addr %s305, 256
        %s307 = scalar_lea.vmem [#allocation2], %s306
        %p308 = pneg %p46
        %p309 = pneg %p43
        %p310 = pneg %p67
        %p311 = pneg %p64
        %p312 = pneg %p88
        %p313 = pneg %p85
        %p314 = pneg %p109
        %p315 = pneg %p106
        %p316 = pneg %p130
        %p317 = pneg %p127
        %p318 = pneg %p151
        %p319 = pneg %p148
        %p320 = pneg %p177
        %p321 = pneg %p174
        %s322 = sand.u32 %s164, 1
        %s323 = scalar_lea.sflag [#allocation4], %s322
        %s324 = sand.u32 %s164, 1
        %s325 = smul.addr %s324, 256
        %s326 = scalar_lea.vmem [#allocation11], %s325
        %s327 = smul.u32 16, %s25
        %s328 = smul.u32 16, %s25
        %v329 = vld [vmem:[%s282] sm:$0xff]
        %v330 = vld [vmem:[%s282 + $0x8] sm:$0xff]
        %v331 = vld [vmem:[%s282 + $0x10] sm:$0xff]
        %v332 = vld [vmem:[%s282 + $0x18] sm:$0xff]
        %v333 = vld [vmem:[%s282 + $0x20] sm:$0xff]
        %v334 = vld [vmem:[%s282 + $0x28] sm:$0xff]
        %v335 = vld [vmem:[%s282 + $0x30] sm:$0xff]
        %v336 = vld [vmem:[%s282 + $0x38] sm:$0xff]
        %v337 = vld [vmem:[%s282 + $0x40] sm:$0xff]
        %v338 = vld [vmem:[%s282 + $0x48] sm:$0xff]
        %v339 = vld [vmem:[%s282 + $0x50] sm:$0xff]
        %v340 = vld [vmem:[%s282 + $0x58] sm:$0xff]
        %v341 = vld [vmem:[%s282 + $0x60] sm:$0xff]
        %v342 = vld [vmem:[%s282 + $0x68] sm:$0xff]
        %v343 = vld [vmem:[%s282 + $0x70] sm:$0xff]
        %v344 = vld [vmem:[%s282 + $0x78] sm:$0xff]
        %v345 = vld [vmem:[%s282 + $0x80] sm:$0xff]
        %v346 = vld [vmem:[%s282 + $0x88] sm:$0xff]
        %v347 = vld [vmem:[%s282 + $0x90] sm:$0xff]
        %v348 = vld [vmem:[%s282 + $0x98] sm:$0xff]
        %v349 = vld [vmem:[%s282 + $0xa0] sm:$0xff]
        %v350 = vld [vmem:[%s282 + $0xa8] sm:$0xff]
        %v351 = vld [vmem:[%s282 + $0xb0] sm:$0xff]
        %v352 = vld [vmem:[%s282 + $0xb8] sm:$0xff]
        %v353 = vld [vmem:[%s282 + $0xc0] sm:$0xff]
        %v354 = vld [vmem:[%s282 + $0xc8] sm:$0xff]
        %v355 = vld [vmem:[%s282 + $0xd0] sm:$0xff]
        %v356 = vld [vmem:[%s282 + $0xd8] sm:$0xff]
        %v357 = vld [vmem:[%s282 + $0xe0] sm:$0xff]
        %v358 = vld [vmem:[%s282 + $0xe8] sm:$0xff]
        %v359 = vld [vmem:[%s282 + $0xf0] sm:$0xff]
        %v360 = vld [vmem:[%s282 + $0xf8] sm:$0xff]
        %v361 = vld [vmem:[#allocation5] sm:$0xff]
        %v362 = vld [vmem:[#allocation5 + $0x8] sm:$0xff]
        %v363 = vld [vmem:[#allocation5 + $0x10] sm:$0xff]
        %v364 = vld [vmem:[#allocation5 + $0x18] sm:$0xff]
        %v365 = vld [vmem:[#allocation5 + $0x20] sm:$0xff]
        %v366 = vld [vmem:[#allocation5 + $0x28] sm:$0xff]
        %v367 = vld [vmem:[#allocation5 + $0x30] sm:$0xff]
        %v368 = vld [vmem:[#allocation5 + $0x38] sm:$0xff]
        %v369 = vld [vmem:[#allocation5 + $0x40] sm:$0xff]
        %v370 = vld [vmem:[#allocation5 + $0x48] sm:$0xff]
        %v371 = vld [vmem:[#allocation5 + $0x50] sm:$0xff]
        %v372 = vld [vmem:[#allocation5 + $0x58] sm:$0xff]
        %v373 = vld [vmem:[#allocation5 + $0x60] sm:$0xff]
        %v374 = vld [vmem:[#allocation5 + $0x68] sm:$0xff]
        %v375 = vld [vmem:[#allocation5 + $0x70] sm:$0xff]
        %v376 = vld [vmem:[#allocation5 + $0x78] sm:$0xff]
        %v377 = vld [vmem:[#allocation5 + $0x80] sm:$0xff]
        %v378 = vld [vmem:[#allocation5 + $0x88] sm:$0xff]
        %v379 = vld [vmem:[#allocation5 + $0x90] sm:$0xff]
        %v380 = vld [vmem:[#allocation5 + $0x98] sm:$0xff]
        %v381 = vld [vmem:[#allocation5 + $0xa0] sm:$0xff]
        %v382 = vld [vmem:[#allocation5 + $0xa8] sm:$0xff]
        %v383 = vld [vmem:[#allocation5 + $0xb0] sm:$0xff]
        %v384 = vld [vmem:[#allocation5 + $0xb8] sm:$0xff]
        %v385 = vld [vmem:[#allocation5 + $0xc0] sm:$0xff]
        %v386 = vld [vmem:[#allocation5 + $0xc8] sm:$0xff]
        %v387 = vld [vmem:[#allocation5 + $0xd0] sm:$0xff]
        %v388 = vld [vmem:[#allocation5 + $0xd8] sm:$0xff]
        %v389 = vld [vmem:[#allocation5 + $0xe0] sm:$0xff]
        %v390 = vld [vmem:[#allocation5 + $0xe8] sm:$0xff]
        %v391 = vld [vmem:[#allocation5 + $0xf0] sm:$0xff]
        %v392 = vld [vmem:[#allocation5 + $0xf8] sm:$0xff]
        %v393 = vld [vmem:[#allocation5 + $0x100] sm:$0xff]
        %v394 = vld [vmem:[#allocation5 + $0x108] sm:$0xff]
        %v395 = vld [vmem:[#allocation5 + $0x110] sm:$0xff]
        %v396 = vld [vmem:[#allocation5 + $0x118] sm:$0xff]
        %v397 = vld [vmem:[#allocation5 + $0x120] sm:$0xff]
        %v398 = vld [vmem:[#allocation5 + $0x128] sm:$0xff]
        %v399 = vld [vmem:[#allocation5 + $0x130] sm:$0xff]
        %v400 = vld [vmem:[#allocation5 + $0x138] sm:$0xff]
        %v401 = vld [vmem:[#allocation5 + $0x140] sm:$0xff]
        %v402 = vld [vmem:[#allocation5 + $0x148] sm:$0xff]
        %v403 = vld [vmem:[#allocation5 + $0x150] sm:$0xff]
        %v404 = vld [vmem:[#allocation5 + $0x158] sm:$0xff]
        %v405 = vld [vmem:[#allocation5 + $0x160] sm:$0xff]
        %v406 = vld [vmem:[#allocation5 + $0x168] sm:$0xff]
        %v407 = vld [vmem:[#allocation5 + $0x170] sm:$0xff]
        %v408 = vld [vmem:[#allocation5 + $0x178] sm:$0xff]
        %v409 = vld [vmem:[#allocation5 + $0x180] sm:$0xff]
        %v410 = vld [vmem:[#allocation5 + $0x188] sm:$0xff]
        %v411 = vld [vmem:[#allocation5 + $0x190] sm:$0xff]
        %v412 = vld [vmem:[#allocation5 + $0x198] sm:$0xff]
        %v413 = vld [vmem:[#allocation5 + $0x1a0] sm:$0xff]
        %v414 = vld [vmem:[#allocation5 + $0x1a8] sm:$0xff]
        %v415 = vld [vmem:[#allocation5 + $0x1b0] sm:$0xff]
        %v416 = vld [vmem:[#allocation5 + $0x1b8] sm:$0xff]
        %v417 = vld [vmem:[#allocation5 + $0x1c0] sm:$0xff]
        %v418 = vld [vmem:[#allocation5 + $0x1c8] sm:$0xff]
        %v419 = vld [vmem:[#allocation5 + $0x1d0] sm:$0xff]
        %v420 = vld [vmem:[#allocation5 + $0x1d8] sm:$0xff]
        %v421 = vld [vmem:[#allocation5 + $0x1e0] sm:$0xff]
        %v422 = vld [vmem:[#allocation5 + $0x1e8] sm:$0xff]
        %v423 = vld [vmem:[#allocation5 + $0x1f0] sm:$0xff]
        %v424 = vld [vmem:[#allocation5 + $0x1f8] sm:$0xff]
        %v425 = vld [vmem:[#allocation5 + $0x200] sm:$0xff]
        %v426 = vld [vmem:[#allocation5 + $0x208] sm:$0xff]
        %v427 = vld [vmem:[#allocation5 + $0x210] sm:$0xff]
        %v428 = vld [vmem:[#allocation5 + $0x218] sm:$0xff]
        %v429 = vld [vmem:[#allocation5 + $0x220] sm:$0xff]
        %v430 = vld [vmem:[#allocation5 + $0x228] sm:$0xff]
        %v431 = vld [vmem:[#allocation5 + $0x230] sm:$0xff]
        %v432 = vld [vmem:[#allocation5 + $0x238] sm:$0xff]
        %v433 = vld [vmem:[#allocation5 + $0x240] sm:$0xff]
        %v434 = vld [vmem:[#allocation5 + $0x248] sm:$0xff]
        %v435 = vld [vmem:[#allocation5 + $0x250] sm:$0xff]
        %v436 = vld [vmem:[#allocation5 + $0x258] sm:$0xff]
        %v437 = vld [vmem:[#allocation5 + $0x260] sm:$0xff]
        %v438 = vld [vmem:[#allocation5 + $0x268] sm:$0xff]
        %v439 = vld [vmem:[#allocation5 + $0x270] sm:$0xff]
        %v440 = vld [vmem:[#allocation5 + $0x278] sm:$0xff]
        %v441 = vld [vmem:[#allocation5 + $0x280] sm:$0xff]
        %v442 = vld [vmem:[#allocation5 + $0x288] sm:$0xff]
        %v443 = vld [vmem:[#allocation5 + $0x290] sm:$0xff]
        %v444 = vld [vmem:[#allocation5 + $0x298] sm:$0xff]
        %v445 = vld [vmem:[#allocation5 + $0x2a0] sm:$0xff]
        %v446 = vld [vmem:[#allocation5 + $0x2a8] sm:$0xff]
        %v447 = vld [vmem:[#allocation5 + $0x2b0] sm:$0xff]
        %v448 = vld [vmem:[#allocation5 + $0x2b8] sm:$0xff]
        %v449 = vld [vmem:[#allocation5 + $0x2c0] sm:$0xff]
        %v450 = vld [vmem:[#allocation5 + $0x2c8] sm:$0xff]
        %v451 = vld [vmem:[#allocation5 + $0x2d0] sm:$0xff]
        %v452 = vld [vmem:[#allocation5 + $0x2d8] sm:$0xff]
        %v453 = vld [vmem:[#allocation5 + $0x2e0] sm:$0xff]
        %v454 = vld [vmem:[#allocation5 + $0x2e8] sm:$0xff]
        %v455 = vld [vmem:[#allocation5 + $0x2f0] sm:$0xff]
        %v456 = vld [vmem:[#allocation5 + $0x2f8] sm:$0xff]
        %v457 = vld [vmem:[#allocation5 + $0x300] sm:$0xff]
        %v458 = vld [vmem:[#allocation5 + $0x308] sm:$0xff]
        %v459 = vld [vmem:[#allocation5 + $0x310] sm:$0xff]
        %v460 = vld [vmem:[#allocation5 + $0x318] sm:$0xff]
        %v461 = vld [vmem:[#allocation5 + $0x320] sm:$0xff]
        %v462 = vld [vmem:[#allocation5 + $0x328] sm:$0xff]
        %v463 = vld [vmem:[#allocation5 + $0x330] sm:$0xff]
        %v464 = vld [vmem:[#allocation5 + $0x338] sm:$0xff]
        %v465 = vld [vmem:[#allocation5 + $0x340] sm:$0xff]
        %v466 = vld [vmem:[#allocation5 + $0x348] sm:$0xff]
        %v467 = vld [vmem:[#allocation5 + $0x350] sm:$0xff]
        %v468 = vld [vmem:[#allocation5 + $0x358] sm:$0xff]
        %v469 = vld [vmem:[#allocation5 + $0x360] sm:$0xff]
        %v470 = vld [vmem:[#allocation5 + $0x368] sm:$0xff]
        %v471 = vld [vmem:[#allocation5 + $0x370] sm:$0xff]
        %v472 = vld [vmem:[#allocation5 + $0x378] sm:$0xff]
        %v473 = vld [vmem:[#allocation5 + $0x380] sm:$0xff]
        %v474 = vld [vmem:[#allocation5 + $0x388] sm:$0xff]
        %v475 = vld [vmem:[#allocation5 + $0x390] sm:$0xff]
        %v476 = vld [vmem:[#allocation5 + $0x398] sm:$0xff]
        %v477 = vld [vmem:[#allocation5 + $0x3a0] sm:$0xff]
        %v478 = vld [vmem:[#allocation5 + $0x3a8] sm:$0xff]
        %v479 = vld [vmem:[#allocation5 + $0x3b0] sm:$0xff]
        %v480 = vld [vmem:[#allocation5 + $0x3b8] sm:$0xff]
        %v481 = vld [vmem:[#allocation5 + $0x3c0] sm:$0xff]
        %v482 = vld [vmem:[#allocation5 + $0x3c8] sm:$0xff]
        %v483 = vld [vmem:[#allocation5 + $0x3d0] sm:$0xff]
        %v484 = vld [vmem:[#allocation5 + $0x3d8] sm:$0xff]
        %v485 = vld [vmem:[#allocation5 + $0x3e0] sm:$0xff]
        %v486 = vld [vmem:[#allocation5 + $0x3e8] sm:$0xff]
        %v487 = vld [vmem:[#allocation5 + $0x3f0] sm:$0xff]
        %v488 = vld [vmem:[#allocation5 + $0x3f8] sm:$0xff]
        %v489 = vld [vmem:[#allocation7] sm:$0xf]
        %v491 = vlaneseq
        %v492 = vshrl.u32 %v491, 7
        %v493 = vsub.s32 0, %v492
        %v494 = vrot.slane %v489, %v493
        %v495 = vlaneseq
        %v496 = vshrl.u32 %v495, 7
        %v497 = vsub.s32 1, %v496
        %v498 = vrot.slane %v489, %v497
        %v499 = vlaneseq
        %v500 = vshrl.u32 %v499, 7
        %v501 = vsub.s32 2, %v500
        %v502 = vrot.slane %v489, %v501
        %v503 = vlaneseq
        %v504 = vshrl.u32 %v503, 7
        %v505 = vsub.s32 3, %v504
        %v506 = vrot.slane %v489, %v505
        %511 = vmatprep.subr.mxu0 %v422
        %512 = vmatpush1.msra.mxu0 %v421
        %513 = vmatprep.subr.mxu0 %v418
        %514 = vmatpush1.msra.mxu0 %v417
        %515 = vmatprep.subr.mxu0 %v414
        %516 = vmatpush1.msra.mxu0 %v413
        %517 = vmatprep.subr.mxu0 %v410
        %518 = vmatpush1.msra.mxu0 %v409
        %519 = vmatprep.subr.mxu0 %v406
        %520 = vmatpush1.msra.mxu0 %v405
        %521 = vmatprep.subr.mxu0 %v402
        %522 = vmatpush1.msra.mxu0 %v401
        %523 = vmatprep.subr.mxu0 %v398
        %524 = vmatpush1.msra.mxu0 %v397
        %525 = vmatprep.subr.mxu0 %v394
        %526 = vmatpush1.msra.mxu0 %v393
        %527 = vmatprep.subr.mxu0 %v390
        %528 = vmatpush1.msra.mxu0 %v389
        %529 = vmatprep.subr.mxu0 %v386
        %530 = vmatpush1.msra.mxu0 %v385
        %531 = vmatprep.subr.mxu0 %v382
        %532 = vmatpush1.msra.mxu0 %v381
        %533 = vmatprep.subr.mxu0 %v378
        %534 = vmatpush1.msra.mxu0 %v377
        %535 = vmatprep.subr.mxu0 %v374
        %536 = vmatpush1.msra.mxu0 %v373
        %537 = vmatprep.subr.mxu0 %v370
        %538 = vmatpush1.msra.mxu0 %v369
        %539 = vmatprep.subr.mxu0 %v366
        %540 = vmatpush1.msra.mxu0 %v365
        %541 = vmatprep.subr.mxu0 %v362
        %542 = vmatpush1.msra.mxu0 %v361
        %543 = vmatprep.subr.mxu0 %v486
        %544 = vmatpush2.msra.mxu0 %v485
        %545 = vmatprep.subr.mxu0 %v482
        %546 = vmatpush2.msra.mxu0 %v481
        %547 = vmatprep.subr.mxu0 %v478
        %548 = vmatpush2.msra.mxu0 %v477
        %549 = vmatprep.subr.mxu0 %v474
        %550 = vmatpush2.msra.mxu0 %v473
        %551 = vmatprep.subr.mxu0 %v470
        %552 = vmatpush2.msra.mxu0 %v469
        %553 = vmatprep.subr.mxu0 %v466
        %554 = vmatpush2.msra.mxu0 %v465
        %555 = vmatprep.subr.mxu0 %v462
        %556 = vmatpush2.msra.mxu0 %v461
        %557 = vmatprep.subr.mxu0 %v458
        %558 = vmatpush2.msra.mxu0 %v457
        %559 = vmatprep.subr.mxu0 %v454
        %560 = vmatpush2.msra.mxu0 %v453
        %561 = vmatprep.subr.mxu0 %v450
        %562 = vmatpush2.msra.mxu0 %v449
        %563 = vmatprep.subr.mxu0 %v446
        %564 = vmatpush2.msra.mxu0 %v445
        %565 = vmatprep.subr.mxu0 %v442
        %566 = vmatpush2.msra.mxu0 %v441
        %567 = vmatprep.subr.mxu0 %v438
        %568 = vmatpush2.msra.mxu0 %v437
        %569 = vmatprep.subr.mxu0 %v434
        %570 = vmatpush2.msra.mxu0 %v433
        %571 = vmatprep.subr.mxu0 %v430
        %572 = vmatpush2.msra.mxu0 %v429
        %573 = vmatprep.subr.mxu0 %v426
        %574 = vmatpush2.msra.mxu0 %v425
        %575 = vmatprep.mubr.f32.mxu0 %v330
        %576 = vmatmul.mubr.f32.gmra.mxu0 %v329
        %v577 = vpop.f32.mrf.mxu0
        %v578 = vadd.f32 %v494, %v577
        %v579 = vpop.f32.mrf.mxu0
        %v580 = vadd.f32 %v498, %v579
        %581 = vmatprep.mubr.f32.mxu0 %v332
        %582 = vmatmul.mubr.f32.gmra.mxu0 %v331
        %v583 = vpop.f32.mrf.mxu0
        %v584 = vadd.f32 %v494, %v583
        %v585 = vpop.f32.mrf.mxu0
        %v586 = vadd.f32 %v498, %v585
        %587 = vmatprep.mubr.f32.mxu0 %v334
        %588 = vmatmul.mubr.f32.gmra.mxu0 %v333
        %v589 = vpop.f32.mrf.mxu0
        %v590 = vadd.f32 %v494, %v589
        %v591 = vpop.f32.mrf.mxu0
        %v592 = vadd.f32 %v498, %v591
        %593 = vmatprep.mubr.f32.mxu0 %v336
        %594 = vmatmul.mubr.f32.gmra.mxu0 %v335
        %v595 = vpop.f32.mrf.mxu0
        %v596 = vadd.f32 %v494, %v595
        %v597 = vpop.f32.mrf.mxu0
        %v598 = vadd.f32 %v498, %v597
        %599 = vmatprep.mubr.f32.mxu0 %v338
        %600 = vmatmul.mubr.f32.gmra.mxu0 %v337
        %v601 = vpop.f32.mrf.mxu0
        %v602 = vadd.f32 %v494, %v601
        %v603 = vpop.f32.mrf.mxu0
        %v604 = vadd.f32 %v498, %v603
        %605 = vmatprep.mubr.f32.mxu0 %v340
        %606 = vmatmul.mubr.f32.gmra.mxu0 %v339
        %v607 = vpop.f32.mrf.mxu0
        %v608 = vadd.f32 %v494, %v607
        %v609 = vpop.f32.mrf.mxu0
        %v610 = vadd.f32 %v498, %v609
        %611 = vmatprep.mubr.f32.mxu0 %v342
        %612 = vmatmul.mubr.f32.gmra.mxu0 %v341
        %v613 = vpop.f32.mrf.mxu0
        %v614 = vadd.f32 %v494, %v613
        %v615 = vpop.f32.mrf.mxu0
        %v616 = vadd.f32 %v498, %v615
        %617 = vmatprep.mubr.f32.mxu0 %v344
        %618 = vmatmul.mubr.f32.gmra.mxu0 %v343
        %v619 = vpop.f32.mrf.mxu0
        %v620 = vadd.f32 %v494, %v619
        %v621 = vpop.f32.mrf.mxu0
        %v622 = vadd.f32 %v498, %v621
        %623 = vmatprep.mubr.f32.mxu0 %v346
        %624 = vmatmul.mubr.f32.gmra.mxu0 %v345
        %v625 = vpop.f32.mrf.mxu0
        %v626 = vadd.f32 %v494, %v625
        %v627 = vpop.f32.mrf.mxu0
        %v628 = vadd.f32 %v498, %v627
        %629 = vmatprep.mubr.f32.mxu0 %v348
        %630 = vmatmul.mubr.f32.gmra.mxu0 %v347
        %v631 = vpop.f32.mrf.mxu0
        %v632 = vadd.f32 %v494, %v631
        %v633 = vpop.f32.mrf.mxu0
        %v634 = vadd.f32 %v498, %v633
        %635 = vmatprep.mubr.f32.mxu0 %v350
        %636 = vmatmul.mubr.f32.gmra.mxu0 %v349
        %v637 = vpop.f32.mrf.mxu0
        %v638 = vadd.f32 %v494, %v637
        %v639 = vpop.f32.mrf.mxu0
        %v640 = vadd.f32 %v498, %v639
        %641 = vmatprep.mubr.f32.mxu0 %v352
        %642 = vmatmul.mubr.f32.gmra.mxu0 %v351
        %v643 = vpop.f32.mrf.mxu0
        %v644 = vadd.f32 %v494, %v643
        %v645 = vpop.f32.mrf.mxu0
        %v646 = vadd.f32 %v498, %v645
        %647 = vmatprep.mubr.f32.mxu0 %v354
        %648 = vmatmul.mubr.f32.gmra.mxu0 %v353
        %v649 = vpop.f32.mrf.mxu0
        %v650 = vadd.f32 %v494, %v649
        %v651 = vpop.f32.mrf.mxu0
        %v652 = vadd.f32 %v498, %v651
        %653 = vmatprep.mubr.f32.mxu0 %v356
        %654 = vmatmul.mubr.f32.gmra.mxu0 %v355
        %v655 = vpop.f32.mrf.mxu0
        %v656 = vadd.f32 %v494, %v655
        %v657 = vpop.f32.mrf.mxu0
        %v658 = vadd.f32 %v498, %v657
        %659 = vmatprep.mubr.f32.mxu0 %v358
        %660 = vmatmul.mubr.f32.gmra.mxu0 %v357
        %v661 = vpop.f32.mrf.mxu0
        %v662 = vadd.f32 %v494, %v661
        %v663 = vpop.f32.mrf.mxu0
        %v664 = vadd.f32 %v498, %v663
        %665 = vmatprep.mubr.f32.mxu0 %v360
        %666 = vmatmul.mubr.f32.gmra.mxu0 %v359
        %v667 = vpop.f32.mrf.mxu0
        %v668 = vadd.f32 %v494, %v667
        %v669 = vpop.f32.mrf.mxu0
        %v670 = vadd.f32 %v498, %v669
        %671 = vdwg.mxu0
        %672 = vmatprep.subr.mxu0 %v424
        %673 = vmatpush1.msra.mxu0 %v423
        %674 = vmatprep.subr.mxu0 %v420
        %675 = vmatpush1.msra.mxu0 %v419
        %676 = vmatprep.subr.mxu0 %v416
        %677 = vmatpush1.msra.mxu0 %v415
        %678 = vmatprep.subr.mxu0 %v412
        %679 = vmatpush1.msra.mxu0 %v411
        %680 = vmatprep.subr.mxu0 %v408
        %681 = vmatpush1.msra.mxu0 %v407
        %682 = vmatprep.subr.mxu0 %v404
        %683 = vmatpush1.msra.mxu0 %v403
        %684 = vmatprep.subr.mxu0 %v400
        %685 = vmatpush1.msra.mxu0 %v399
        %686 = vmatprep.subr.mxu0 %v396
        %687 = vmatpush1.msra.mxu0 %v395
        %688 = vmatprep.subr.mxu0 %v392
        %689 = vmatpush1.msra.mxu0 %v391
        %690 = vmatprep.subr.mxu0 %v388
        %691 = vmatpush1.msra.mxu0 %v387
        %692 = vmatprep.subr.mxu0 %v384
        %693 = vmatpush1.msra.mxu0 %v383
        %694 = vmatprep.subr.mxu0 %v380
        %695 = vmatpush1.msra.mxu0 %v379
        %696 = vmatprep.subr.mxu0 %v376
        %697 = vmatpush1.msra.mxu0 %v375
        %698 = vmatprep.subr.mxu0 %v372
        %699 = vmatpush1.msra.mxu0 %v371
        %700 = vmatprep.subr.mxu0 %v368
        %701 = vmatpush1.msra.mxu0 %v367
        %702 = vmatprep.subr.mxu0 %v364
        %703 = vmatpush1.msra.mxu0 %v363
        %704 = vmatprep.subr.mxu0 %v488
        %705 = vmatpush2.msra.mxu0 %v487
        %706 = vmatprep.subr.mxu0 %v484
        %707 = vmatpush2.msra.mxu0 %v483
        %708 = vmatprep.subr.mxu0 %v480
        %709 = vmatpush2.msra.mxu0 %v479
        %710 = vmatprep.subr.mxu0 %v476
        %711 = vmatpush2.msra.mxu0 %v475
        %712 = vmatprep.subr.mxu0 %v472
        %713 = vmatpush2.msra.mxu0 %v471
        %714 = vmatprep.subr.mxu0 %v468
        %715 = vmatpush2.msra.mxu0 %v467
        %716 = vmatprep.subr.mxu0 %v464
        %717 = vmatpush2.msra.mxu0 %v463
        %718 = vmatprep.subr.mxu0 %v460
        %719 = vmatpush2.msra.mxu0 %v459
        %720 = vmatprep.subr.mxu0 %v456
        %721 = vmatpush2.msra.mxu0 %v455
        %722 = vmatprep.subr.mxu0 %v452
        %723 = vmatpush2.msra.mxu0 %v451
        %724 = vmatprep.subr.mxu0 %v448
        %725 = vmatpush2.msra.mxu0 %v447
        %726 = vmatprep.subr.mxu0 %v444
        %727 = vmatpush2.msra.mxu0 %v443
        %728 = vmatprep.subr.mxu0 %v440
        %729 = vmatpush2.msra.mxu0 %v439
        %730 = vmatprep.subr.mxu0 %v436
        %731 = vmatpush2.msra.mxu0 %v435
        %732 = vmatprep.subr.mxu0 %v432
        %733 = vmatpush2.msra.mxu0 %v431
        %734 = vmatprep.subr.mxu0 %v428
        %735 = vmatpush2.msra.mxu0 %v427
        %736 = vmatprep.mubr.f32.mxu0 %v330
        %737 = vmatmul.mubr.f32.gmra.mxu0 %v329
        %v738 = vpop.f32.mrf.mxu0
        %v739 = vadd.f32 %v502, %v738
        %v740 = vpop.f32.mrf.mxu0
        %v741 = vadd.f32 %v506, %v740
        %742 = vmatprep.mubr.f32.mxu0 %v332
        %743 = vmatmul.mubr.f32.gmra.mxu0 %v331
        %v744 = vpop.f32.mrf.mxu0
        %v745 = vadd.f32 %v502, %v744
        %v746 = vpop.f32.mrf.mxu0
        %v747 = vadd.f32 %v506, %v746
        %748 = vmatprep.mubr.f32.mxu0 %v334
        %749 = vmatmul.mubr.f32.gmra.mxu0 %v333
        %v750 = vpop.f32.mrf.mxu0
        %v751 = vadd.f32 %v502, %v750
        %v752 = vpop.f32.mrf.mxu0
        %v753 = vadd.f32 %v506, %v752
        %754 = vmatprep.mubr.f32.mxu0 %v336
        %755 = vmatmul.mubr.f32.gmra.mxu0 %v335
        %v756 = vpop.f32.mrf.mxu0
        %v757 = vadd.f32 %v502, %v756
        %v758 = vpop.f32.mrf.mxu0
        %v759 = vadd.f32 %v506, %v758
        %760 = vmatprep.mubr.f32.mxu0 %v338
        %761 = vmatmul.mubr.f32.gmra.mxu0 %v337
        %v762 = vpop.f32.mrf.mxu0
        %v763 = vadd.f32 %v502, %v762
        %v764 = vpop.f32.mrf.mxu0
        %v765 = vadd.f32 %v506, %v764
        %766 = vmatprep.mubr.f32.mxu0 %v340
        %767 = vmatmul.mubr.f32.gmra.mxu0 %v339
        %v768 = vpop.f32.mrf.mxu0
        %v769 = vadd.f32 %v502, %v768
        %v770 = vpop.f32.mrf.mxu0
        %v771 = vadd.f32 %v506, %v770
        %772 = vmatprep.mubr.f32.mxu0 %v342
        %773 = vmatmul.mubr.f32.gmra.mxu0 %v341
        %v774 = vpop.f32.mrf.mxu0
        %v775 = vadd.f32 %v502, %v774
        %v776 = vpop.f32.mrf.mxu0
        %v777 = vadd.f32 %v506, %v776
        %778 = vmatprep.mubr.f32.mxu0 %v344
        %779 = vmatmul.mubr.f32.gmra.mxu0 %v343
        %v780 = vpop.f32.mrf.mxu0
        %v781 = vadd.f32 %v502, %v780
        %v782 = vpop.f32.mrf.mxu0
        %v783 = vadd.f32 %v506, %v782
        %784 = vmatprep.mubr.f32.mxu0 %v346
        %785 = vmatmul.mubr.f32.gmra.mxu0 %v345
        %v786 = vpop.f32.mrf.mxu0
        %v787 = vadd.f32 %v502, %v786
        %v788 = vpop.f32.mrf.mxu0
        %v789 = vadd.f32 %v506, %v788
        %790 = vmatprep.mubr.f32.mxu0 %v348
        %791 = vmatmul.mubr.f32.gmra.mxu0 %v347
        %v792 = vpop.f32.mrf.mxu0
        %v793 = vadd.f32 %v502, %v792
        %v794 = vpop.f32.mrf.mxu0
        %v795 = vadd.f32 %v506, %v794
        %796 = vmatprep.mubr.f32.mxu0 %v350
        %797 = vmatmul.mubr.f32.gmra.mxu0 %v349
        %v798 = vpop.f32.mrf.mxu0
        %v799 = vadd.f32 %v502, %v798
        %v800 = vpop.f32.mrf.mxu0
        %v801 = vadd.f32 %v506, %v800
        %802 = vmatprep.mubr.f32.mxu0 %v352
        %803 = vmatmul.mubr.f32.gmra.mxu0 %v351
        %v804 = vpop.f32.mrf.mxu0
        %v805 = vadd.f32 %v502, %v804
        %v806 = vpop.f32.mrf.mxu0
        %v807 = vadd.f32 %v506, %v806
        %808 = vmatprep.mubr.f32.mxu0 %v354
        %809 = vmatmul.mubr.f32.gmra.mxu0 %v353
        %v810 = vpop.f32.mrf.mxu0
        %v811 = vadd.f32 %v502, %v810
        %v812 = vpop.f32.mrf.mxu0
        %v813 = vadd.f32 %v506, %v812
        %814 = vmatprep.mubr.f32.mxu0 %v356
        %815 = vmatmul.mubr.f32.gmra.mxu0 %v355
        %v816 = vpop.f32.mrf.mxu0
        %v817 = vadd.f32 %v502, %v816
        %v818 = vpop.f32.mrf.mxu0
        %v819 = vadd.f32 %v506, %v818
        %820 = vmatprep.mubr.f32.mxu0 %v358
        %821 = vmatmul.mubr.f32.gmra.mxu0 %v357
        %v822 = vpop.f32.mrf.mxu0
        %v823 = vadd.f32 %v502, %v822
        %v824 = vpop.f32.mrf.mxu0
        %v825 = vadd.f32 %v506, %v824
        %826 = vmatprep.mubr.f32.mxu0 %v360
        %827 = vmatmul.mubr.f32.gmra.mxu0 %v359
        %v828 = vpop.f32.mrf.mxu0
        %v829 = vadd.f32 %v502, %v828
        %v830 = vpop.f32.mrf.mxu0
        %v831 = vadd.f32 %v506, %v830
        %832 = vdwg.mxu0
        %v833 = vld [vmem:[#allocation8] sm:$0xff]
        %v834 = vld [vmem:[#allocation8 + $0x8] sm:$0xff]
        %v835 = vld [vmem:[#allocation8 + $0x10] sm:$0xff]
        %v836 = vld [vmem:[#allocation8 + $0x18] sm:$0xff]
        %v837 = vld [vmem:[#allocation8 + $0x20] sm:$0xff]
        %v838 = vld [vmem:[#allocation8 + $0x28] sm:$0xff]
        %v839 = vld [vmem:[#allocation8 + $0x30] sm:$0xff]
        %v840 = vld [vmem:[#allocation8 + $0x38] sm:$0xff]
        %v841 = vld [vmem:[#allocation8 + $0x40] sm:$0xff]
        %v842 = vld [vmem:[#allocation8 + $0x48] sm:$0xff]
        %v843 = vld [vmem:[#allocation8 + $0x50] sm:$0xff]
        %v844 = vld [vmem:[#allocation8 + $0x58] sm:$0xff]
        %v845 = vld [vmem:[#allocation8 + $0x60] sm:$0xff]
        %v846 = vld [vmem:[#allocation8 + $0x68] sm:$0xff]
        %v847 = vld [vmem:[#allocation8 + $0x70] sm:$0xff]
        %v848 = vld [vmem:[#allocation8 + $0x78] sm:$0xff]
        %v849 = vld [vmem:[#allocation8 + $0x80] sm:$0xff]
        %v850 = vld [vmem:[#allocation8 + $0x88] sm:$0xff]
        %v851 = vld [vmem:[#allocation8 + $0x90] sm:$0xff]
        %v852 = vld [vmem:[#allocation8 + $0x98] sm:$0xff]
        %v853 = vld [vmem:[#allocation8 + $0xa0] sm:$0xff]
        %v854 = vld [vmem:[#allocation8 + $0xa8] sm:$0xff]
        %v855 = vld [vmem:[#allocation8 + $0xb0] sm:$0xff]
        %v856 = vld [vmem:[#allocation8 + $0xb8] sm:$0xff]
        %v857 = vld [vmem:[#allocation8 + $0xc0] sm:$0xff]
        %v858 = vld [vmem:[#allocation8 + $0xc8] sm:$0xff]
        %v859 = vld [vmem:[#allocation8 + $0xd0] sm:$0xff]
        %v860 = vld [vmem:[#allocation8 + $0xd8] sm:$0xff]
        %v861 = vld [vmem:[#allocation8 + $0xe0] sm:$0xff]
        %v862 = vld [vmem:[#allocation8 + $0xe8] sm:$0xff]
        %v863 = vld [vmem:[#allocation8 + $0xf0] sm:$0xff]
        %v864 = vld [vmem:[#allocation8 + $0xf8] sm:$0xff]
        %v865 = vld [vmem:[#allocation8 + $0x100] sm:$0xff]
        %v866 = vld [vmem:[#allocation8 + $0x108] sm:$0xff]
        %v867 = vld [vmem:[#allocation8 + $0x110] sm:$0xff]
        %v868 = vld [vmem:[#allocation8 + $0x118] sm:$0xff]
        %v869 = vld [vmem:[#allocation8 + $0x120] sm:$0xff]
        %v870 = vld [vmem:[#allocation8 + $0x128] sm:$0xff]
        %v871 = vld [vmem:[#allocation8 + $0x130] sm:$0xff]
        %v872 = vld [vmem:[#allocation8 + $0x138] sm:$0xff]
        %v873 = vld [vmem:[#allocation8 + $0x140] sm:$0xff]
        %v874 = vld [vmem:[#allocation8 + $0x148] sm:$0xff]
        %v875 = vld [vmem:[#allocation8 + $0x150] sm:$0xff]
        %v876 = vld [vmem:[#allocation8 + $0x158] sm:$0xff]
        %v877 = vld [vmem:[#allocation8 + $0x160] sm:$0xff]
        %v878 = vld [vmem:[#allocation8 + $0x168] sm:$0xff]
        %v879 = vld [vmem:[#allocation8 + $0x170] sm:$0xff]
        %v880 = vld [vmem:[#allocation8 + $0x178] sm:$0xff]
        %v881 = vld [vmem:[#allocation8 + $0x180] sm:$0xff]
        %v882 = vld [vmem:[#allocation8 + $0x188] sm:$0xff]
        %v883 = vld [vmem:[#allocation8 + $0x190] sm:$0xff]
        %v884 = vld [vmem:[#allocation8 + $0x198] sm:$0xff]
        %v885 = vld [vmem:[#allocation8 + $0x1a0] sm:$0xff]
        %v886 = vld [vmem:[#allocation8 + $0x1a8] sm:$0xff]
        %v887 = vld [vmem:[#allocation8 + $0x1b0] sm:$0xff]
        %v888 = vld [vmem:[#allocation8 + $0x1b8] sm:$0xff]
        %v889 = vld [vmem:[#allocation8 + $0x1c0] sm:$0xff]
        %v890 = vld [vmem:[#allocation8 + $0x1c8] sm:$0xff]
        %v891 = vld [vmem:[#allocation8 + $0x1d0] sm:$0xff]
        %v892 = vld [vmem:[#allocation8 + $0x1d8] sm:$0xff]
        %v893 = vld [vmem:[#allocation8 + $0x1e0] sm:$0xff]
        %v894 = vld [vmem:[#allocation8 + $0x1e8] sm:$0xff]
        %v895 = vld [vmem:[#allocation8 + $0x1f0] sm:$0xff]
        %v896 = vld [vmem:[#allocation8 + $0x1f8] sm:$0xff]
        %v897 = vmul.f32 %v578, %v578
        %v898 = vmul.f32 %v580, %v580
        %v899 = vmul.f32 %v584, %v584
        %v900 = vmul.f32 %v586, %v586
        %v901 = vmul.f32 %v590, %v590
        %v902 = vmul.f32 %v592, %v592
        %v903 = vmul.f32 %v596, %v596
        %v904 = vmul.f32 %v598, %v598
        %v905 = vmul.f32 %v602, %v602
        %v906 = vmul.f32 %v604, %v604
        %v907 = vmul.f32 %v608, %v608
        %v908 = vmul.f32 %v610, %v610
        %v909 = vmul.f32 %v614, %v614
        %v910 = vmul.f32 %v616, %v616
        %v911 = vmul.f32 %v620, %v620
        %v912 = vmul.f32 %v622, %v622
        %v913 = vmul.f32 %v626, %v626
        %v914 = vmul.f32 %v628, %v628
        %v915 = vmul.f32 %v632, %v632
        %v916 = vmul.f32 %v634, %v634
        %v917 = vmul.f32 %v638, %v638
        %v918 = vmul.f32 %v640, %v640
        %v919 = vmul.f32 %v644, %v644
        %v920 = vmul.f32 %v646, %v646
        %v921 = vmul.f32 %v650, %v650
        %v922 = vmul.f32 %v652, %v652
        %v923 = vmul.f32 %v656, %v656
        %v924 = vmul.f32 %v658, %v658
        %v925 = vmul.f32 %v662, %v662
        %v926 = vmul.f32 %v664, %v664
        %v927 = vmul.f32 %v668, %v668
        %v928 = vmul.f32 %v670, %v670
        %929 = vmatprep.subr.mxu0 %v864
        %930 = vmatpush1.msra.mxu0 %v863
        %931 = vmatprep.subr.mxu0 %v862
        %932 = vmatpush1.msra.mxu0 %v861
        %933 = vmatprep.subr.mxu0 %v860
        %934 = vmatpush1.msra.mxu0 %v859
        %935 = vmatprep.subr.mxu0 %v858
        %936 = vmatpush1.msra.mxu0 %v857
        %937 = vmatprep.subr.mxu0 %v856
        %938 = vmatpush1.msra.mxu0 %v855
        %939 = vmatprep.subr.mxu0 %v854
        %940 = vmatpush1.msra.mxu0 %v853
        %941 = vmatprep.subr.mxu0 %v852
        %942 = vmatpush1.msra.mxu0 %v851
        %943 = vmatprep.subr.mxu0 %v850
        %944 = vmatpush1.msra.mxu0 %v849
        %945 = vmatprep.subr.mxu0 %v848
        %946 = vmatpush1.msra.mxu0 %v847
        %947 = vmatprep.subr.mxu0 %v846
        %948 = vmatpush1.msra.mxu0 %v845
        %949 = vmatprep.subr.mxu0 %v844
        %950 = vmatpush1.msra.mxu0 %v843
        %951 = vmatprep.subr.mxu0 %v842
        %952 = vmatpush1.msra.mxu0 %v841
        %953 = vmatprep.subr.mxu0 %v840
        %954 = vmatpush1.msra.mxu0 %v839
        %955 = vmatprep.subr.mxu0 %v838
        %956 = vmatpush1.msra.mxu0 %v837
        %957 = vmatprep.subr.mxu0 %v836
        %958 = vmatpush1.msra.mxu0 %v835
        %959 = vmatprep.subr.mxu0 %v834
        %960 = vmatpush1.msra.mxu0 %v833
        %961 = vmatprep.subr.mxu0 %v896
        %962 = vmatpush2.msra.mxu0 %v895
        %963 = vmatprep.subr.mxu0 %v894
        %964 = vmatpush2.msra.mxu0 %v893
        %965 = vmatprep.subr.mxu0 %v892
        %966 = vmatpush2.msra.mxu0 %v891
        %967 = vmatprep.subr.mxu0 %v890
        %968 = vmatpush2.msra.mxu0 %v889
        %969 = vmatprep.subr.mxu0 %v888
        %970 = vmatpush2.msra.mxu0 %v887
        %971 = vmatprep.subr.mxu0 %v886
        %972 = vmatpush2.msra.mxu0 %v885
        %973 = vmatprep.subr.mxu0 %v884
        %974 = vmatpush2.msra.mxu0 %v883
        %975 = vmatprep.subr.mxu0 %v882
        %976 = vmatpush2.msra.mxu0 %v881
        %977 = vmatprep.subr.mxu0 %v880
        %978 = vmatpush2.msra.mxu0 %v879
        %979 = vmatprep.subr.mxu0 %v878
        %980 = vmatpush2.msra.mxu0 %v877
        %981 = vmatprep.subr.mxu0 %v876
        %982 = vmatpush2.msra.mxu0 %v875
        %983 = vmatprep.subr.mxu0 %v874
        %984 = vmatpush2.msra.mxu0 %v873
        %985 = vmatprep.subr.mxu0 %v872
        %986 = vmatpush2.msra.mxu0 %v871
        %987 = vmatprep.subr.mxu0 %v870
        %988 = vmatpush2.msra.mxu0 %v869
        %989 = vmatprep.subr.mxu0 %v868
        %990 = vmatpush2.msra.mxu0 %v867
        %991 = vmatprep.subr.mxu0 %v866
        %992 = vmatpush2.msra.mxu0 %v865
        %993 = vmatprep.mubr.f32.mxu0 %v898
        %994 = vmatmul.mubr.f32.gmra.mxu0 %v897
        %v995 = vpop.f32.mrf.mxu0
        %v996 = vadd.f32 0.0, %v995
        %v997 = vpop.f32.mrf.mxu0
        %v998 = vadd.f32 0.0, %v997
        %999 = vmatprep.mubr.f32.mxu0 %v900
        %1000 = vmatmul.mubr.f32.gmra.mxu0 %v899
        %v1001 = vpop.f32.mrf.mxu0
        %v1002 = vadd.f32 0.0, %v1001
        %v1003 = vpop.f32.mrf.mxu0
        %v1004 = vadd.f32 0.0, %v1003
        %1005 = vmatprep.mubr.f32.mxu0 %v902
        %1006 = vmatmul.mubr.f32.gmra.mxu0 %v901
        %v1007 = vpop.f32.mrf.mxu0
        %v1008 = vadd.f32 0.0, %v1007
        %v1009 = vpop.f32.mrf.mxu0
        %v1010 = vadd.f32 0.0, %v1009
        %1011 = vmatprep.mubr.f32.mxu0 %v904
        %1012 = vmatmul.mubr.f32.gmra.mxu0 %v903
        %v1013 = vpop.f32.mrf.mxu0
        %v1014 = vadd.f32 0.0, %v1013
        %v1015 = vpop.f32.mrf.mxu0
        %v1016 = vadd.f32 0.0, %v1015
        %1017 = vmatprep.mubr.f32.mxu0 %v906
        %1018 = vmatmul.mubr.f32.gmra.mxu0 %v905
        %v1019 = vpop.f32.mrf.mxu0
        %v1020 = vadd.f32 0.0, %v1019
        %v1021 = vpop.f32.mrf.mxu0
        %v1022 = vadd.f32 0.0, %v1021
        %1023 = vmatprep.mubr.f32.mxu0 %v908
        %1024 = vmatmul.mubr.f32.gmra.mxu0 %v907
        %v1025 = vpop.f32.mrf.mxu0
        %v1026 = vadd.f32 0.0, %v1025
        %v1027 = vpop.f32.mrf.mxu0
        %v1028 = vadd.f32 0.0, %v1027
        %1029 = vmatprep.mubr.f32.mxu0 %v910
        %1030 = vmatmul.mubr.f32.gmra.mxu0 %v909
        %v1031 = vpop.f32.mrf.mxu0
        %v1032 = vadd.f32 0.0, %v1031
        %v1033 = vpop.f32.mrf.mxu0
        %v1034 = vadd.f32 0.0, %v1033
        %1035 = vmatprep.mubr.f32.mxu0 %v912
        %1036 = vmatmul.mubr.f32.gmra.mxu0 %v911
        %v1037 = vpop.f32.mrf.mxu0
        %v1038 = vadd.f32 0.0, %v1037
        %v1039 = vpop.f32.mrf.mxu0
        %v1040 = vadd.f32 0.0, %v1039
        %1041 = vmatprep.mubr.f32.mxu0 %v914
        %1042 = vmatmul.mubr.f32.gmra.mxu0 %v913
        %v1043 = vpop.f32.mrf.mxu0
        %v1044 = vadd.f32 0.0, %v1043
        %v1045 = vpop.f32.mrf.mxu0
        %v1046 = vadd.f32 0.0, %v1045
        %1047 = vmatprep.mubr.f32.mxu0 %v916
        %1048 = vmatmul.mubr.f32.gmra.mxu0 %v915
        %v1049 = vpop.f32.mrf.mxu0
        %v1050 = vadd.f32 0.0, %v1049
        %v1051 = vpop.f32.mrf.mxu0
        %v1052 = vadd.f32 0.0, %v1051
        %1053 = vmatprep.mubr.f32.mxu0 %v918
        %1054 = vmatmul.mubr.f32.gmra.mxu0 %v917
        %v1055 = vpop.f32.mrf.mxu0
        %v1056 = vadd.f32 0.0, %v1055
        %v1057 = vpop.f32.mrf.mxu0
        %v1058 = vadd.f32 0.0, %v1057
        %1059 = vmatprep.mubr.f32.mxu0 %v920
        %1060 = vmatmul.mubr.f32.gmra.mxu0 %v919
        %v1061 = vpop.f32.mrf.mxu0
        %v1062 = vadd.f32 0.0, %v1061
        %v1063 = vpop.f32.mrf.mxu0
        %v1064 = vadd.f32 0.0, %v1063
        %1065 = vmatprep.mubr.f32.mxu0 %v922
        %1066 = vmatmul.mubr.f32.gmra.mxu0 %v921
        %v1067 = vpop.f32.mrf.mxu0
        %v1068 = vadd.f32 0.0, %v1067
        %v1069 = vpop.f32.mrf.mxu0
        %v1070 = vadd.f32 0.0, %v1069
        %1071 = vmatprep.mubr.f32.mxu0 %v924
        %1072 = vmatmul.mubr.f32.gmra.mxu0 %v923
        %v1073 = vpop.f32.mrf.mxu0
        %v1074 = vadd.f32 0.0, %v1073
        %v1075 = vpop.f32.mrf.mxu0
        %v1076 = vadd.f32 0.0, %v1075
        %1077 = vmatprep.mubr.f32.mxu0 %v926
        %1078 = vmatmul.mubr.f32.gmra.mxu0 %v925
        %v1079 = vpop.f32.mrf.mxu0
        %v1080 = vadd.f32 0.0, %v1079
        %v1081 = vpop.f32.mrf.mxu0
        %v1082 = vadd.f32 0.0, %v1081
        %1083 = vmatprep.mubr.f32.mxu0 %v928
        %1084 = vmatmul.mubr.f32.gmra.mxu0 %v927
        %v1085 = vpop.f32.mrf.mxu0
        %v1086 = vadd.f32 0.0, %v1085
        %v1087 = vpop.f32.mrf.mxu0
        %v1088 = vadd.f32 0.0, %v1087
        %1089 = vdwg.mxu0
        %v1090 = vmul.f32 %v739, %v739
        %v1091 = vmul.f32 %v741, %v741
        %v1092 = vmul.f32 %v745, %v745
        %v1093 = vmul.f32 %v747, %v747
        %v1094 = vmul.f32 %v751, %v751
        %v1095 = vmul.f32 %v753, %v753
        %v1096 = vmul.f32 %v757, %v757
        %v1097 = vmul.f32 %v759, %v759
        %v1098 = vmul.f32 %v763, %v763
        %v1099 = vmul.f32 %v765, %v765
        %v1100 = vmul.f32 %v769, %v769
        %v1101 = vmul.f32 %v771, %v771
        %v1102 = vmul.f32 %v775, %v775
        %v1103 = vmul.f32 %v777, %v777
        %v1104 = vmul.f32 %v781, %v781
        %v1105 = vmul.f32 %v783, %v783
        %v1106 = vmul.f32 %v787, %v787
        %v1107 = vmul.f32 %v789, %v789
        %v1108 = vmul.f32 %v793, %v793
        %v1109 = vmul.f32 %v795, %v795
        %v1110 = vmul.f32 %v799, %v799
        %v1111 = vmul.f32 %v801, %v801
        %v1112 = vmul.f32 %v805, %v805
        %v1113 = vmul.f32 %v807, %v807
        %v1114 = vmul.f32 %v811, %v811
        %v1115 = vmul.f32 %v813, %v813
        %v1116 = vmul.f32 %v817, %v817
        %v1117 = vmul.f32 %v819, %v819
        %v1118 = vmul.f32 %v823, %v823
        %v1119 = vmul.f32 %v825, %v825
        %v1120 = vmul.f32 %v829, %v829
        %v1121 = vmul.f32 %v831, %v831
        %v1122 = vsub.f32 %v996, %v1090
        %v1123 = vsub.f32 %v998, %v1091
        %v1124 = vsub.f32 %v1002, %v1092
        %v1125 = vsub.f32 %v1004, %v1093
        %v1126 = vsub.f32 %v1008, %v1094
        %v1127 = vsub.f32 %v1010, %v1095
        %v1128 = vsub.f32 %v1014, %v1096
        %v1129 = vsub.f32 %v1016, %v1097
        %v1130 = vsub.f32 %v1020, %v1098
        %v1131 = vsub.f32 %v1022, %v1099
        %v1132 = vsub.f32 %v1026, %v1100
        %v1133 = vsub.f32 %v1028, %v1101
        %v1134 = vsub.f32 %v1032, %v1102
        %v1135 = vsub.f32 %v1034, %v1103
        %v1136 = vsub.f32 %v1038, %v1104
        %v1137 = vsub.f32 %v1040, %v1105
        %v1138 = vsub.f32 %v1044, %v1106
        %v1139 = vsub.f32 %v1046, %v1107
        %v1140 = vsub.f32 %v1050, %v1108
        %v1141 = vsub.f32 %v1052, %v1109
        %v1142 = vsub.f32 %v1056, %v1110
        %v1143 = vsub.f32 %v1058, %v1111
        %v1144 = vsub.f32 %v1062, %v1112
        %v1145 = vsub.f32 %v1064, %v1113
        %v1146 = vsub.f32 %v1068, %v1114
        %v1147 = vsub.f32 %v1070, %v1115
        %v1148 = vsub.f32 %v1074, %v1116
        %v1149 = vsub.f32 %v1076, %v1117
        %v1150 = vsub.f32 %v1080, %v1118
        %v1151 = vsub.f32 %v1082, %v1119
        %v1152 = vsub.f32 %v1086, %v1120
        %v1153 = vsub.f32 %v1088, %v1121
        %v1154 = vmax.f32 %v1122, 0.0
        %v1155 = vmax.f32 %v1123, 0.0
        %v1156 = vmax.f32 %v1124, 0.0
        %v1157 = vmax.f32 %v1125, 0.0
        %v1158 = vmax.f32 %v1126, 0.0
        %v1159 = vmax.f32 %v1127, 0.0
        %v1160 = vmax.f32 %v1128, 0.0
        %v1161 = vmax.f32 %v1129, 0.0
        %v1162 = vmax.f32 %v1130, 0.0
        %v1163 = vmax.f32 %v1131, 0.0
        %v1164 = vmax.f32 %v1132, 0.0
        %v1165 = vmax.f32 %v1133, 0.0
        %v1166 = vmax.f32 %v1134, 0.0
        %v1167 = vmax.f32 %v1135, 0.0
        %v1168 = vmax.f32 %v1136, 0.0
        %v1169 = vmax.f32 %v1137, 0.0
        %v1170 = vmax.f32 %v1138, 0.0
        %v1171 = vmax.f32 %v1139, 0.0
        %v1172 = vmax.f32 %v1140, 0.0
        %v1173 = vmax.f32 %v1141, 0.0
        %v1174 = vmax.f32 %v1142, 0.0
        %v1175 = vmax.f32 %v1143, 0.0
        %v1176 = vmax.f32 %v1144, 0.0
        %v1177 = vmax.f32 %v1145, 0.0
        %v1178 = vmax.f32 %v1146, 0.0
        %v1179 = vmax.f32 %v1147, 0.0
        %v1180 = vmax.f32 %v1148, 0.0
        %v1181 = vmax.f32 %v1149, 0.0
        %v1182 = vmax.f32 %v1150, 0.0
        %v1183 = vmax.f32 %v1151, 0.0
        %v1184 = vmax.f32 %v1152, 0.0
        %v1185 = vmax.f32 %v1153, 0.0
        %v1186 = vsub.f32 %v578, %v739
        %v1187 = vsub.f32 %v580, %v741
        %v1188 = vsub.f32 %v584, %v745
        %v1189 = vsub.f32 %v586, %v747
        %v1190 = vsub.f32 %v590, %v751
        %v1191 = vsub.f32 %v592, %v753
        %v1192 = vsub.f32 %v596, %v757
        %v1193 = vsub.f32 %v598, %v759
        %v1194 = vsub.f32 %v602, %v763
        %v1195 = vsub.f32 %v604, %v765
        %v1196 = vsub.f32 %v608, %v769
        %v1197 = vsub.f32 %v610, %v771
        %v1198 = vsub.f32 %v614, %v775
        %v1199 = vsub.f32 %v616, %v777
        %v1200 = vsub.f32 %v620, %v781
        %v1201 = vsub.f32 %v622, %v783
        %v1202 = vsub.f32 %v626, %v787
        %v1203 = vsub.f32 %v628, %v789
        %v1204 = vsub.f32 %v632, %v793
        %v1205 = vsub.f32 %v634, %v795
        %v1206 = vsub.f32 %v638, %v799
        %v1207 = vsub.f32 %v640, %v801
        %v1208 = vsub.f32 %v644, %v805
        %v1209 = vsub.f32 %v646, %v807
        %v1210 = vsub.f32 %v650, %v811
        %v1211 = vsub.f32 %v652, %v813
        %v1212 = vsub.f32 %v656, %v817
        %v1213 = vsub.f32 %v658, %v819
        %v1214 = vsub.f32 %v662, %v823
        %v1215 = vsub.f32 %v664, %v825
        %v1216 = vsub.f32 %v668, %v829
        %v1217 = vsub.f32 %v670, %v831
        %v1218 = vadd.f32 %v1154, 1e-05
        %v1219 = vadd.f32 %v1155, 1e-05
        %v1220 = vadd.f32 %v1156, 1e-05
        %v1221 = vadd.f32 %v1157, 1e-05
        %v1222 = vadd.f32 %v1158, 1e-05
        %v1223 = vadd.f32 %v1159, 1e-05
        %v1224 = vadd.f32 %v1160, 1e-05
        %v1225 = vadd.f32 %v1161, 1e-05
        %v1226 = vadd.f32 %v1162, 1e-05
        %v1227 = vadd.f32 %v1163, 1e-05
        %v1228 = vadd.f32 %v1164, 1e-05
        %v1229 = vadd.f32 %v1165, 1e-05
        %v1230 = vadd.f32 %v1166, 1e-05
        %v1231 = vadd.f32 %v1167, 1e-05
        %v1232 = vadd.f32 %v1168, 1e-05
        %v1233 = vadd.f32 %v1169, 1e-05
        %v1234 = vadd.f32 %v1170, 1e-05
        %v1235 = vadd.f32 %v1171, 1e-05
        %v1236 = vadd.f32 %v1172, 1e-05
        %v1237 = vadd.f32 %v1173, 1e-05
        %v1238 = vadd.f32 %v1174, 1e-05
        %v1239 = vadd.f32 %v1175, 1e-05
        %v1240 = vadd.f32 %v1176, 1e-05
        %v1241 = vadd.f32 %v1177, 1e-05
        %v1242 = vadd.f32 %v1178, 1e-05
        %v1243 = vadd.f32 %v1179, 1e-05
        %v1244 = vadd.f32 %v1180, 1e-05
        %v1245 = vadd.f32 %v1181, 1e-05
        %v1246 = vadd.f32 %v1182, 1e-05
        %v1247 = vadd.f32 %v1183, 1e-05
        %v1248 = vadd.f32 %v1184, 1e-05
        %v1249 = vadd.f32 %v1185, 1e-05
        %v1250 = vrsqrt.pop %v1218
        %v1251 = vrsqrt.pop %v1219
        %v1252 = vrsqrt.pop %v1220
        %v1253 = vrsqrt.pop %v1221
        %v1254 = vrsqrt.pop %v1222
        %v1255 = vrsqrt.pop %v1223
        %v1256 = vrsqrt.pop %v1224
        %v1257 = vrsqrt.pop %v1225
        %v1258 = vrsqrt.pop %v1226
        %v1259 = vrsqrt.pop %v1227
        %v1260 = vrsqrt.pop %v1228
        %v1261 = vrsqrt.pop %v1229
        %v1262 = vrsqrt.pop %v1230
        %v1263 = vrsqrt.pop %v1231
        %v1264 = vrsqrt.pop %v1232
        %v1265 = vrsqrt.pop %v1233
        %v1266 = vrsqrt.pop %v1234
        %v1267 = vrsqrt.pop %v1235
        %v1268 = vrsqrt.pop %v1236
        %v1269 = vrsqrt.pop %v1237
        %v1270 = vrsqrt.pop %v1238
        %v1271 = vrsqrt.pop %v1239
        %v1272 = vrsqrt.pop %v1240
        %v1273 = vrsqrt.pop %v1241
        %v1274 = vrsqrt.pop %v1242
        %v1275 = vrsqrt.pop %v1243
        %v1276 = vrsqrt.pop %v1244
        %v1277 = vrsqrt.pop %v1245
        %v1278 = vrsqrt.pop %v1246
        %v1279 = vrsqrt.pop %v1247
        %v1280 = vrsqrt.pop %v1248
        %v1281 = vrsqrt.pop %v1249
        %v1282 = vmul.f32 %v1186, %v1250
        %v1283 = vmul.f32 %v1187, %v1251
        %v1284 = vmul.f32 %v1188, %v1252
        %v1285 = vmul.f32 %v1189, %v1253
        %v1286 = vmul.f32 %v1190, %v1254
        %v1287 = vmul.f32 %v1191, %v1255
        %v1288 = vmul.f32 %v1192, %v1256
        %v1289 = vmul.f32 %v1193, %v1257
        %v1290 = vmul.f32 %v1194, %v1258
        %v1291 = vmul.f32 %v1195, %v1259
        %v1292 = vmul.f32 %v1196, %v1260
        %v1293 = vmul.f32 %v1197, %v1261
        %v1294 = vmul.f32 %v1198, %v1262
        %v1295 = vmul.f32 %v1199, %v1263
        %v1296 = vmul.f32 %v1200, %v1264
        %v1297 = vmul.f32 %v1201, %v1265
        %v1298 = vmul.f32 %v1202, %v1266
        %v1299 = vmul.f32 %v1203, %v1267
        %v1300 = vmul.f32 %v1204, %v1268
        %v1301 = vmul.f32 %v1205, %v1269
        %v1302 = vmul.f32 %v1206, %v1270
        %v1303 = vmul.f32 %v1207, %v1271
        %v1304 = vmul.f32 %v1208, %v1272
        %v1305 = vmul.f32 %v1209, %v1273
        %v1306 = vmul.f32 %v1210, %v1274
        %v1307 = vmul.f32 %v1211, %v1275
        %v1308 = vmul.f32 %v1212, %v1276
        %v1309 = vmul.f32 %v1213, %v1277
        %v1310 = vmul.f32 %v1214, %v1278
        %v1311 = vmul.f32 %v1215, %v1279
        %v1312 = vmul.f32 %v1216, %v1280
        %v1313 = vmul.f32 %v1217, %v1281
        %v1314 = vld [vmem:[#allocation10] sm:$0xff]
        %v1315 = vld [vmem:[#allocation10 + $0x8] sm:$0xff]
        %v1316 = vld [vmem:[#allocation10 + $0x10] sm:$0xff]
        %v1317 = vld [vmem:[#allocation10 + $0x18] sm:$0xff]
        %v1318 = vld [vmem:[#allocation10 + $0x20] sm:$0xff]
        %v1319 = vld [vmem:[#allocation10 + $0x28] sm:$0xff]
        %v1320 = vld [vmem:[#allocation10 + $0x30] sm:$0xff]
        %v1321 = vld [vmem:[#allocation10 + $0x38] sm:$0xff]
        %v1322 = vld [vmem:[#allocation10 + $0x40] sm:$0xff]
        %v1323 = vld [vmem:[#allocation10 + $0x48] sm:$0xff]
        %v1324 = vld [vmem:[#allocation10 + $0x50] sm:$0xff]
        %v1325 = vld [vmem:[#allocation10 + $0x58] sm:$0xff]
        %v1326 = vld [vmem:[#allocation10 + $0x60] sm:$0xff]
        %v1327 = vld [vmem:[#allocation10 + $0x68] sm:$0xff]
        %v1328 = vld [vmem:[#allocation10 + $0x70] sm:$0xff]
        %v1329 = vld [vmem:[#allocation10 + $0x78] sm:$0xff]
        %v1330 = vld [vmem:[#allocation10 + $0x80] sm:$0xff]
        %v1331 = vld [vmem:[#allocation10 + $0x88] sm:$0xff]
        %v1332 = vld [vmem:[#allocation10 + $0x90] sm:$0xff]
        %v1333 = vld [vmem:[#allocation10 + $0x98] sm:$0xff]
        %v1334 = vld [vmem:[#allocation10 + $0xa0] sm:$0xff]
        %v1335 = vld [vmem:[#allocation10 + $0xa8] sm:$0xff]
        %v1336 = vld [vmem:[#allocation10 + $0xb0] sm:$0xff]
        %v1337 = vld [vmem:[#allocation10 + $0xb8] sm:$0xff]
        %v1338 = vld [vmem:[#allocation10 + $0xc0] sm:$0xff]
        %v1339 = vld [vmem:[#allocation10 + $0xc8] sm:$0xff]
        %v1340 = vld [vmem:[#allocation10 + $0xd0] sm:$0xff]
        %v1341 = vld [vmem:[#allocation10 + $0xd8] sm:$0xff]
        %v1342 = vld [vmem:[#allocation10 + $0xe0] sm:$0xff]
        %v1343 = vld [vmem:[#allocation10 + $0xe8] sm:$0xff]
        %v1344 = vld [vmem:[#allocation10 + $0xf0] sm:$0xff]
        %v1345 = vld [vmem:[#allocation10 + $0xf8] sm:$0xff]
        %v1346 = vld [vmem:[#allocation10 + $0x100] sm:$0xff]
        %v1347 = vld [vmem:[#allocation10 + $0x108] sm:$0xff]
        %v1348 = vld [vmem:[#allocation10 + $0x110] sm:$0xff]
        %v1349 = vld [vmem:[#allocation10 + $0x118] sm:$0xff]
        %v1350 = vld [vmem:[#allocation10 + $0x120] sm:$0xff]
        %v1351 = vld [vmem:[#allocation10 + $0x128] sm:$0xff]
        %v1352 = vld [vmem:[#allocation10 + $0x130] sm:$0xff]
        %v1353 = vld [vmem:[#allocation10 + $0x138] sm:$0xff]
        %v1354 = vld [vmem:[#allocation10 + $0x140] sm:$0xff]
        %v1355 = vld [vmem:[#allocation10 + $0x148] sm:$0xff]
        %v1356 = vld [vmem:[#allocation10 + $0x150] sm:$0xff]
        %v1357 = vld [vmem:[#allocation10 + $0x158] sm:$0xff]
        %v1358 = vld [vmem:[#allocation10 + $0x160] sm:$0xff]
        %v1359 = vld [vmem:[#allocation10 + $0x168] sm:$0xff]
        %v1360 = vld [vmem:[#allocation10 + $0x170] sm:$0xff]
        %v1361 = vld [vmem:[#allocation10 + $0x178] sm:$0xff]
        %v1362 = vld [vmem:[#allocation10 + $0x180] sm:$0xff]
        %v1363 = vld [vmem:[#allocation10 + $0x188] sm:$0xff]
        %v1364 = vld [vmem:[#allocation10 + $0x190] sm:$0xff]
        %v1365 = vld [vmem:[#allocation10 + $0x198] sm:$0xff]
        %v1366 = vld [vmem:[#allocation10 + $0x1a0] sm:$0xff]
        %v1367 = vld [vmem:[#allocation10 + $0x1a8] sm:$0xff]
        %v1368 = vld [vmem:[#allocation10 + $0x1b0] sm:$0xff]
        %v1369 = vld [vmem:[#allocation10 + $0x1b8] sm:$0xff]
        %v1370 = vld [vmem:[#allocation10 + $0x1c0] sm:$0xff]
        %v1371 = vld [vmem:[#allocation10 + $0x1c8] sm:$0xff]
        %v1372 = vld [vmem:[#allocation10 + $0x1d0] sm:$0xff]
        %v1373 = vld [vmem:[#allocation10 + $0x1d8] sm:$0xff]
        %v1374 = vld [vmem:[#allocation10 + $0x1e0] sm:$0xff]
        %v1375 = vld [vmem:[#allocation10 + $0x1e8] sm:$0xff]
        %v1376 = vld [vmem:[#allocation10 + $0x1f0] sm:$0xff]
        %v1377 = vld [vmem:[#allocation10 + $0x1f8] sm:$0xff]
        %v1378 = vld [vmem:[%s5] sm:$0x3]
        %v1380 = vlaneseq
        %v1381 = vshrl.u32 %v1380, 7
        %v1382 = vsub.s32 0, %v1381
        %v1383 = vrot.slane %v1378, %v1382
        %v1384 = vlaneseq
        %v1385 = vshrl.u32 %v1384, 7
        %v1386 = vsub.s32 1, %v1385
        %v1387 = vrot.slane %v1378, %v1386
        %1390 = vmatprep.subr.mxu0 %v1345
        %1391 = vmatpush1.msra.mxu0 %v1344
        %1392 = vmatprep.subr.mxu0 %v1343
        %1393 = vmatpush1.msra.mxu0 %v1342
        %1394 = vmatprep.subr.mxu0 %v1341
        %1395 = vmatpush1.msra.mxu0 %v1340
        %1396 = vmatprep.subr.mxu0 %v1339
        %1397 = vmatpush1.msra.mxu0 %v1338
        %1398 = vmatprep.subr.mxu0 %v1337
        %1399 = vmatpush1.msra.mxu0 %v1336
        %1400 = vmatprep.subr.mxu0 %v1335
        %1401 = vmatpush1.msra.mxu0 %v1334
        %1402 = vmatprep.subr.mxu0 %v1333
        %1403 = vmatpush1.msra.mxu0 %v1332
        %1404 = vmatprep.subr.mxu0 %v1331
        %1405 = vmatpush1.msra.mxu0 %v1330
        %1406 = vmatprep.subr.mxu0 %v1329
        %1407 = vmatpush1.msra.mxu0 %v1328
        %1408 = vmatprep.subr.mxu0 %v1327
        %1409 = vmatpush1.msra.mxu0 %v1326
        %1410 = vmatprep.subr.mxu0 %v1325
        %1411 = vmatpush1.msra.mxu0 %v1324
        %1412 = vmatprep.subr.mxu0 %v1323
        %1413 = vmatpush1.msra.mxu0 %v1322
        %1414 = vmatprep.subr.mxu0 %v1321
        %1415 = vmatpush1.msra.mxu0 %v1320
        %1416 = vmatprep.subr.mxu0 %v1319
        %1417 = vmatpush1.msra.mxu0 %v1318
        %1418 = vmatprep.subr.mxu0 %v1317
        %1419 = vmatpush1.msra.mxu0 %v1316
        %1420 = vmatprep.subr.mxu0 %v1315
        %1421 = vmatpush1.msra.mxu0 %v1314
        %1422 = vmatprep.subr.mxu0 %v1377
        %1423 = vmatpush2.msra.mxu0 %v1376
        %1424 = vmatprep.subr.mxu0 %v1375
        %1425 = vmatpush2.msra.mxu0 %v1374
        %1426 = vmatprep.subr.mxu0 %v1373
        %1427 = vmatpush2.msra.mxu0 %v1372
        %1428 = vmatprep.subr.mxu0 %v1371
        %1429 = vmatpush2.msra.mxu0 %v1370
        %1430 = vmatprep.subr.mxu0 %v1369
        %1431 = vmatpush2.msra.mxu0 %v1368
        %1432 = vmatprep.subr.mxu0 %v1367
        %1433 = vmatpush2.msra.mxu0 %v1366
        %1434 = vmatprep.subr.mxu0 %v1365
        %1435 = vmatpush2.msra.mxu0 %v1364
        %1436 = vmatprep.subr.mxu0 %v1363
        %1437 = vmatpush2.msra.mxu0 %v1362
        %1438 = vmatprep.subr.mxu0 %v1361
        %1439 = vmatpush2.msra.mxu0 %v1360
        %1440 = vmatprep.subr.mxu0 %v1359
        %1441 = vmatpush2.msra.mxu0 %v1358
        %1442 = vmatprep.subr.mxu0 %v1357
        %1443 = vmatpush2.msra.mxu0 %v1356
        %1444 = vmatprep.subr.mxu0 %v1355
        %1445 = vmatpush2.msra.mxu0 %v1354
        %1446 = vmatprep.subr.mxu0 %v1353
        %1447 = vmatpush2.msra.mxu0 %v1352
        %1448 = vmatprep.subr.mxu0 %v1351
        %1449 = vmatpush2.msra.mxu0 %v1350
        %1450 = vmatprep.subr.mxu0 %v1349
        %1451 = vmatpush2.msra.mxu0 %v1348
        %1452 = vmatprep.subr.mxu0 %v1347
        %1453 = vmatpush2.msra.mxu0 %v1346
        %1454 = vmatprep.mubr.f32.mxu0 %v1283
        %1455 = vmatmul.mubr.f32.gmra.mxu0 %v1282
        %v1456 = vpop.f32.mrf.mxu0
        %v1457 = vadd.f32 %v1383, %v1456
        %v1458 = vpop.f32.mrf.mxu0
        %v1459 = vadd.f32 %v1387, %v1458
        %1460 = vmatprep.mubr.f32.mxu0 %v1285
        %1461 = vmatmul.mubr.f32.gmra.mxu0 %v1284
        %v1462 = vpop.f32.mrf.mxu0
        %v1463 = vadd.f32 %v1383, %v1462
        %v1464 = vpop.f32.mrf.mxu0
        %v1465 = vadd.f32 %v1387, %v1464
        %1466 = vmatprep.mubr.f32.mxu0 %v1287
        %1467 = vmatmul.mubr.f32.gmra.mxu0 %v1286
        %v1468 = vpop.f32.mrf.mxu0
        %v1469 = vadd.f32 %v1383, %v1468
        %v1470 = vpop.f32.mrf.mxu0
        %v1471 = vadd.f32 %v1387, %v1470
        %1472 = vmatprep.mubr.f32.mxu0 %v1289
        %1473 = vmatmul.mubr.f32.gmra.mxu0 %v1288
        %v1474 = vpop.f32.mrf.mxu0
        %v1475 = vadd.f32 %v1383, %v1474
        %v1476 = vpop.f32.mrf.mxu0
        %v1477 = vadd.f32 %v1387, %v1476
        %1478 = vmatprep.mubr.f32.mxu0 %v1291
        %1479 = vmatmul.mubr.f32.gmra.mxu0 %v1290
        %v1480 = vpop.f32.mrf.mxu0
        %v1481 = vadd.f32 %v1383, %v1480
        %v1482 = vpop.f32.mrf.mxu0
        %v1483 = vadd.f32 %v1387, %v1482
        %1484 = vmatprep.mubr.f32.mxu0 %v1293
        %1485 = vmatmul.mubr.f32.gmra.mxu0 %v1292
        %v1486 = vpop.f32.mrf.mxu0
        %v1487 = vadd.f32 %v1383, %v1486
        %v1488 = vpop.f32.mrf.mxu0
        %v1489 = vadd.f32 %v1387, %v1488
        %1490 = vmatprep.mubr.f32.mxu0 %v1295
        %1491 = vmatmul.mubr.f32.gmra.mxu0 %v1294
        %v1492 = vpop.f32.mrf.mxu0
        %v1493 = vadd.f32 %v1383, %v1492
        %v1494 = vpop.f32.mrf.mxu0
        %v1495 = vadd.f32 %v1387, %v1494
        %1496 = vmatprep.mubr.f32.mxu0 %v1297
        %1497 = vmatmul.mubr.f32.gmra.mxu0 %v1296
        %v1498 = vpop.f32.mrf.mxu0
        %v1499 = vadd.f32 %v1383, %v1498
        %v1500 = vpop.f32.mrf.mxu0
        %v1501 = vadd.f32 %v1387, %v1500
        %1502 = vmatprep.mubr.f32.mxu0 %v1299
        %1503 = vmatmul.mubr.f32.gmra.mxu0 %v1298
        %v1504 = vpop.f32.mrf.mxu0
        %v1505 = vadd.f32 %v1383, %v1504
        %v1506 = vpop.f32.mrf.mxu0
        %v1507 = vadd.f32 %v1387, %v1506
        %1508 = vmatprep.mubr.f32.mxu0 %v1301
        %1509 = vmatmul.mubr.f32.gmra.mxu0 %v1300
        %v1510 = vpop.f32.mrf.mxu0
        %v1511 = vadd.f32 %v1383, %v1510
        %v1512 = vpop.f32.mrf.mxu0
        %v1513 = vadd.f32 %v1387, %v1512
        %1514 = vmatprep.mubr.f32.mxu0 %v1303
        %1515 = vmatmul.mubr.f32.gmra.mxu0 %v1302
        %v1516 = vpop.f32.mrf.mxu0
        %v1517 = vadd.f32 %v1383, %v1516
        %v1518 = vpop.f32.mrf.mxu0
        %v1519 = vadd.f32 %v1387, %v1518
        %1520 = vmatprep.mubr.f32.mxu0 %v1305
        %1521 = vmatmul.mubr.f32.gmra.mxu0 %v1304
        %v1522 = vpop.f32.mrf.mxu0
        %v1523 = vadd.f32 %v1383, %v1522
        %v1524 = vpop.f32.mrf.mxu0
        %v1525 = vadd.f32 %v1387, %v1524
        %1526 = vmatprep.mubr.f32.mxu0 %v1307
        %1527 = vmatmul.mubr.f32.gmra.mxu0 %v1306
        %v1528 = vpop.f32.mrf.mxu0
        %v1529 = vadd.f32 %v1383, %v1528
        %v1530 = vpop.f32.mrf.mxu0
        %v1531 = vadd.f32 %v1387, %v1530
        %1532 = vmatprep.mubr.f32.mxu0 %v1309
        %1533 = vmatmul.mubr.f32.gmra.mxu0 %v1308
        %v1534 = vpop.f32.mrf.mxu0
        %v1535 = vadd.f32 %v1383, %v1534
        %v1536 = vpop.f32.mrf.mxu0
        %v1537 = vadd.f32 %v1387, %v1536
        %1538 = vmatprep.mubr.f32.mxu0 %v1311
        %1539 = vmatmul.mubr.f32.gmra.mxu0 %v1310
        %v1540 = vpop.f32.mrf.mxu0
        %v1541 = vadd.f32 %v1383, %v1540
        %v1542 = vpop.f32.mrf.mxu0
        %v1543 = vadd.f32 %v1387, %v1542
        %1544 = vmatprep.mubr.f32.mxu0 %v1313
        %1545 = vmatmul.mubr.f32.gmra.mxu0 %v1312
        %v1546 = vpop.f32.mrf.mxu0
        %v1547 = vadd.f32 %v1383, %v1546
        %v1548 = vpop.f32.mrf.mxu0
        %v1549 = vadd.f32 %v1387, %v1548
        %1550 = vdwg.mxu0
        %v1551 = vmax.f32 %v1457, 0.0
        %v1552 = vmax.f32 %v1459, 0.0
        %v1553 = vmax.f32 %v1463, 0.0
        %v1554 = vmax.f32 %v1465, 0.0
        %v1555 = vmax.f32 %v1469, 0.0
        %v1556 = vmax.f32 %v1471, 0.0
        %v1557 = vmax.f32 %v1475, 0.0
        %v1558 = vmax.f32 %v1477, 0.0
        %v1559 = vmax.f32 %v1481, 0.0
        %v1560 = vmax.f32 %v1483, 0.0
        %v1561 = vmax.f32 %v1487, 0.0
        %v1562 = vmax.f32 %v1489, 0.0
        %v1563 = vmax.f32 %v1493, 0.0
        %v1564 = vmax.f32 %v1495, 0.0
        %v1565 = vmax.f32 %v1499, 0.0
        %v1566 = vmax.f32 %v1501, 0.0
        %v1567 = vmax.f32 %v1505, 0.0
        %v1568 = vmax.f32 %v1507, 0.0
        %v1569 = vmax.f32 %v1511, 0.0
        %v1570 = vmax.f32 %v1513, 0.0
        %v1571 = vmax.f32 %v1517, 0.0
        %v1572 = vmax.f32 %v1519, 0.0
        %v1573 = vmax.f32 %v1523, 0.0
        %v1574 = vmax.f32 %v1525, 0.0
        %v1575 = vmax.f32 %v1529, 0.0
        %v1576 = vmax.f32 %v1531, 0.0
        %v1577 = vmax.f32 %v1535, 0.0
        %v1578 = vmax.f32 %v1537, 0.0
        %v1579 = vmax.f32 %v1541, 0.0
        %v1580 = vmax.f32 %v1543, 0.0
        %v1581 = vmax.f32 %v1547, 0.0
        %v1582 = vmax.f32 %v1549, 0.0
        %1583 = vst [vmem:[%s326] sm:$0xff] %v1551
        %1584 = vst [vmem:[%s326 + $0x8] sm:$0xff] %v1552
        %1585 = vst [vmem:[%s326 + $0x10] sm:$0xff] %v1553
        %1586 = vst [vmem:[%s326 + $0x18] sm:$0xff] %v1554
        %1587 = vst [vmem:[%s326 + $0x20] sm:$0xff] %v1555
        %1588 = vst [vmem:[%s326 + $0x28] sm:$0xff] %v1556
        %1589 = vst [vmem:[%s326 + $0x30] sm:$0xff] %v1557
        %1590 = vst [vmem:[%s326 + $0x38] sm:$0xff] %v1558
        %1591 = vst [vmem:[%s326 + $0x40] sm:$0xff] %v1559
        %1592 = vst [vmem:[%s326 + $0x48] sm:$0xff] %v1560
        %1593 = vst [vmem:[%s326 + $0x50] sm:$0xff] %v1561
        %1594 = vst [vmem:[%s326 + $0x58] sm:$0xff] %v1562
        %1595 = vst [vmem:[%s326 + $0x60] sm:$0xff] %v1563
        %1596 = vst [vmem:[%s326 + $0x68] sm:$0xff] %v1564
        %1597 = vst [vmem:[%s326 + $0x70] sm:$0xff] %v1565
        %1598 = vst [vmem:[%s326 + $0x78] sm:$0xff] %v1566
        %1599 = vst [vmem:[%s326 + $0x80] sm:$0xff] %v1567
        %1600 = vst [vmem:[%s326 + $0x88] sm:$0xff] %v1568
        %1601 = vst [vmem:[%s326 + $0x90] sm:$0xff] %v1569
        %1602 = vst [vmem:[%s326 + $0x98] sm:$0xff] %v1570
        %1603 = vst [vmem:[%s326 + $0xa0] sm:$0xff] %v1571
        %1604 = vst [vmem:[%s326 + $0xa8] sm:$0xff] %v1572
        %1605 = vst [vmem:[%s326 + $0xb0] sm:$0xff] %v1573
        %1606 = vst [vmem:[%s326 + $0xb8] sm:$0xff] %v1574
        %1607 = vst [vmem:[%s326 + $0xc0] sm:$0xff] %v1575
        %1608 = vst [vmem:[%s326 + $0xc8] sm:$0xff] %v1576
        %1609 = vst [vmem:[%s326 + $0xd0] sm:$0xff] %v1577
        %1610 = vst [vmem:[%s326 + $0xd8] sm:$0xff] %v1578
        %1611 = vst [vmem:[%s326 + $0xe0] sm:$0xff] %v1579
        %1612 = vst [vmem:[%s326 + $0xe8] sm:$0xff] %v1580
        %1613 = vst [vmem:[%s326 + $0xf0] sm:$0xff] %v1581
        %1614 = vst [vmem:[%s326 + $0xf8] sm:$0xff] %v1582
        %s1615 = sand.u32 %s164, 1
        %s1616 = scalar_lea.sflag [#allocation4], %s1615
        %s1617 = sand.u32 %s164, 1
        %s1618 = smul.addr %s1617, 256
        %s1619 = scalar_lea.vmem [#allocation11], %s1618
        // Predicated region
        $region65: #{tpu_custom_call.1} parent=43 // pred_check
          %p1620 = pneg %p174
        $region66: #{tpu_custom_call.1} parent=43 // pred_check_branch
          %1622 = sbr.rel (%p1620) target = $region68
        $region67: #{tpu_custom_call.1} parent=43 // pred_region
          %s1623 = smul.u32 16, %s25
          %s1625 = ssub.s32 4096, 4096
          %1626 = vsyncadd %s1616, %s1625
          %s1627 = smul.addr %s1623, 2
          %s1628 = smul.addr %s1627, 128
          %s1629 = scalar_lea.hbm %s6, %s1628
          %s1630 = sshll.u32 %s1619, 4
          %s1631 = int_to_ptr.vmem [resolvable:$true] %s1630
          %1636 = dma.vmem_to_hbm [thread:$0]  %s1631, 4096, %s1629, %s1616, 256, 256, 16
        $region68: #{tpu_custom_call.1} parent=43 // pred_fallthru
          _
      $region44: #{tpu_custom_call.1} parent=5 // pred_fallthru
        _
      %p1637 = scmp.le.s32.totalorder 2, %s20
      // Predicated region
      $region69: #{tpu_custom_call.1} parent=5 // pred_check
        %p1638 = pneg %p1637
      $region70: #{tpu_custom_call.1} parent=5 // pred_check_branch
        %1640 = sbr.rel (%p1638) target = $region72
      $region71: #{tpu_custom_call.1} parent=5 // pred_region
        %s1641 = ssub.s32 %s20, 2
        // Predicated region
        $region73: #{tpu_custom_call.1} parent=71 // pred_check
          %p1642 = pneg %p180
        $region74: #{tpu_custom_call.1} parent=71 // pred_check_branch
          %1644 = sbr.rel (%p1642) target = $region76
        $region75: #{tpu_custom_call.1} parent=71 // pred_region
          %s1645 = sand.u32 %s165, 1
          %s1646 = scalar_lea.sflag [#allocation4], %s1645
          %s1647 = sand.u32 %s165, 1
          %s1648 = smul.addr %s1647, 256
          %s1649 = scalar_lea.vmem [#allocation11], %s1648
          %1650 = dma.done %s1646, 4096
        $region76: #{tpu_custom_call.1} parent=71 // pred_fallthru
          _
      $region72: #{tpu_custom_call.1} parent=5 // pred_fallthru
        _
    $region6: #{tpu_custom_call.1} parent=1 // loop_footer
      %s24 = sadd.s32 1, %s20
    $region7: #{tpu_custom_call.1} parent=1 // loop_footer_branch
      %19 = sbr.rel target = $region3
    $region8: #{tpu_custom_call.1} parent=1 // loop_exit
      _
    %1651 = vsyncpa [#allocation3], 1
    %s1652 = scalar_lea.sflag [#allocation3], 1
    %1653 = vsyncpa %s1652, 1
    %1654 = vsyncpa [#allocation6], 1
    %1655 = vsyncpa [#allocation9], 1
    %1656 = vsyncpa [#allocation4], 1
    %s1657 = scalar_lea.sflag [#allocation4], 1
    %1658 = vsyncpa %s1657, 1

</llo_original>
